<compile_context>
chip_gen: v5e
topology: v5e:2x2
jax: 0.10.0
libtpu: 0.0.40
codegen_flags: <defaults>
</compile_context>

<pallas_src>
import jax
import jax.numpy as jnp
from jax import lax
from jax.experimental import pallas as pl
from jax.experimental.pallas import tpu as pltpu


GATE_PAD = 128   # per-gate lane padding (vreg lane width)
B_PAD = 8        # sublane padding for batch


def tower_two_kernel(xp_ref,              # [T*8, 2E]  bf16, rows t*8.. = [x_t | x_{T-1-t}]
                     wih_ref,             # [2E, 3*128] bf16, block-diag per gate, lane-padded
                     bi_ref,              # [1, 3*128]  f32   b_ih (+ b_hh for r,z), lane-padded
                     whh_ref,             # [128, 3*128] bf16, rows 2H:128 zero
                     bhn_ref,             # [1, 128]    f32   b_hn (fwd|bwd), lane-padded
                     ln_g_ref, ln_b_ref,  # [1, 2H]     f32
                     w1_ref, b1_ref,      # [2H, H] bf16, [1, H] f32
                     w2_ref, b2_ref,      # [H, H//2] bf16, [1, H//2] f32
                     out_ref):            # [8, H//2]   f32
    TB = xp_ref.shape[0]
    BP = out_ref.shape[0]            # 8 (padded batch)
    T = TB // BP
    H2 = w1_ref.shape[0]             # 2H
    G = GATE_PAD                     # 128

    # ---- hoisted input projection: all timesteps, both directions, one matmul ----
    gi = jnp.dot(xp_ref[...], wih_ref[...],
                 preferred_element_type=jnp.float32) + bi_ref[...]     # [T*8, 3*128]

    whh = whh_ref[...]
    bhn = bhn_ref[...]

    # Hidden state carried lane-padded: lanes 0:2H = [h_fwd | h_bwd], lanes 2H:128
    # stay exactly zero (zero weight rows/cols + zero bias padding keep them zero).
    h = jnp.zeros((BP, G), jnp.float32)

    # Fully unrolled recurrence (T static). Every slice below is 8-row /
    # 128-lane aligned -> no sub-vreg extraction on the serial path.
    for t in range(T):
        gi_t = gi[t * BP:(t + 1) * BP, :]                              # static slice
        gh = jnp.dot(h.astype(jnp.bfloat16), whh,
                     preferred_element_type=jnp.float32)               # [8, 3*128]
        # sigmoid(x) = 0.5 * tanh(0.5 x) + 0.5  (one EUP op per vreg) on r|z slab
        rz = 0.5 * jnp.tanh(0.5 * (gi_t[:, 0:2 * G] + gh[:, 0:2 * G])) + 0.5
        r = rz[:, 0:G]
        z = rz[:, G:2 * G]
        n = jnp.tanh(gi_t[:, 2 * G:3 * G] + r * (gh[:, 2 * G:3 * G] + bhn))
        h = (1.0 - z) * n + z * h

    # ---- LayerNorm(2H): one-off post-loop extract of the real lanes ----
    hc = h[:, 0:H2]                                                    # [8, 2H]
    mu = jnp.mean(hc, axis=-1, keepdims=True)
    var = jnp.mean((hc - mu) ** 2, axis=-1, keepdims=True)
    xn = (hc - mu) * lax.rsqrt(var + 1e-5) * ln_g_ref[...] + ln_b_ref[...]

    # ---- Linear -> ReLU -> (Dropout = identity in eval) -> Linear ----
    h1 = jnp.dot(xn.astype(jnp.bfloat16), w1_ref[...],
                 preferred_element_type=jnp.float32) + b1_ref[...]
    h1 = jnp.maximum(h1, 0.0)
    out = jnp.dot(h1.astype(jnp.bfloat16), w2_ref[...],
                  preferred_element_type=jnp.float32) + b2_ref[...]
    # One-off store; H//2=16 lanes -> masked vst, acceptable (low priority).
    out_ref[...] = out.astype(out_ref.dtype)


def _blockdiag(a, b):
    ra, ca = a.shape
    rb, cb = b.shape
    out = jnp.zeros((ra + rb, ca + cb), jnp.float32)
    out = out.at[:ra, :ca].set(a)
    out = out.at[ra:, ca:].set(b)
    return out


def _pad_cols(w, width):
    return jnp.pad(w, ((0, 0), (0, width - w.shape[1])))


def prepare_kernel_params(p, E, H):
    """Repack per-direction PyTorch-layout params into the fused, lane-padded
    kernel layout.  Call ONCE at init; result is reused across forward calls."""
    bf = jnp.bfloat16
    H2 = 2 * H
    G = GATE_PAD

    def gate(w, i):                       # w: [K, 3H], gate order [r, z, n]
        return w[:, i * H:(i + 1) * H]

    def bgate(b, i):                      # b: [1, 3H]
        return b[:, i * H:(i + 1) * H]

    # Input weights: per-gate block-diag (fwd, bwd) [2E, 2H] padded to 128 lanes,
    # concat gates -> [2E, 3*128].
    wih = jnp.concatenate(
        [_pad_cols(_blockdiag(gate(p["wih_f"], i), gate(p["wih_b"], i)), G)
         for i in range(3)], axis=1)

    # Recurrent weights: per-gate block-diag [2H, 2H] padded to 128 lanes,
    # concat gates -> [2H, 3*128], then pad rows to 128 (h carried lane-padded).
    whh = jnp.concatenate(
        [_pad_cols(_blockdiag(gate(p["whh_f"], i), gate(p["whh_b"], i)), G)
         for i in range(3)], axis=1)
    whh = jnp.pad(whh, ((0, G - H2), (0, 0)))                     # [128, 3*128]

    # Biases: fold b_hh into b_ih for r and z gates; keep b_hn separate.
    def fused_bias(i, include_bhh):
        f = bgate(p["bih_f"], i) + (bgate(p["bhh_f"], i) if include_bhh else 0.0)
        b = bgate(p["bih_b"], i) + (bgate(p["bhh_b"], i) if include_bhh else 0.0)
        return _pad_cols(jnp.concatenate([f, b], axis=1), G)

    bi = jnp.concatenate([fused_bias(0, True), fused_bias(1, True),
                          fused_bias(2, False)], axis=1)           # [1, 3*128]
    bhn = _pad_cols(jnp.concatenate([bgate(p["bhh_f"], 2),
                                     bgate(p["bhh_b"], 2)], axis=1), G)  # [1, 128]

    return dict(
        wih=wih.astype(bf), bi=bi.astype(jnp.float32),
        whh=whh.astype(bf), bhn=bhn.astype(jnp.float32),
        ln_g=p["ln_g"].astype(jnp.float32), ln_b=p["ln_b"].astype(jnp.float32),
        w1=p["w1"].astype(bf), b1=p["b1"].astype(jnp.float32),
        w2=p["w2"].astype(bf), b2=p["b2"].astype(jnp.float32),
    )


def tower_two_forward(x, kp):
    """x: [B, T, E] float32 (batch_first).  kp: prepacked params (prepare_kernel_params)."""
    B, T, E = x.shape
    assert B <= B_PAD, "batch > 8 needs a grid over batch tiles"  # TODO(synk)
    H = kp["w2"].shape[0]

    # Pair each timestep with its reverse-direction partner and pad batch to 8
    # sublanes so every per-step read inside the kernel is a full aligned tile.
    x_tm = jnp.transpose(x, (1, 0, 2))                        # [T, B, E]
    xp = jnp.concatenate([x_tm, x_tm[::-1]], axis=-1)         # [T, B, 2E]
    xp = jnp.pad(xp, ((0, 0), (0, B_PAD - B), (0, 0)))        # [T, 8, 2E]
    xp = xp.reshape(T * B_PAD, 2 * E).astype(jnp.bfloat16)

    args = (xp, kp["wih"], kp["bi"], kp["whh"], kp["bhn"],
            kp["ln_g"], kp["ln_b"], kp["w1"], kp["b1"], kp["w2"], kp["b2"])

    out = pl.pallas_call(
        tower_two_kernel,
        out_shape=jax.ShapeDtypeStruct((B_PAD, H // 2), jnp.float32),
        # No grid: whole problem (~100 KB) is fully VMEM-resident.
        in_specs=[pl.BlockSpec(memory_space=pltpu.VMEM) for _ in args],
        out_specs=pl.BlockSpec(memory_space=pltpu.VMEM),
    )(*args)
    return out[:B]


def init_params(key, E, H):
    """Deterministic synthetic init matching PyTorch parameter shapes."""
    ks = jax.random.split(key, 16)
    k_gru = 1.0 / jnp.sqrt(H)

    def u(k, shape, scale):
        return jax.random.uniform(k, shape, jnp.float32, -scale, scale)

    return dict(
        # GRU weights stored transposed for x @ W: (E,3H), (H,3H); gate order [r,z,n]
        wih_f=u(ks[0], (E, 3 * H), k_gru), whh_f=u(ks[1], (H, 3 * H), k_gru),
        bih_f=u(ks[2], (1, 3 * H), k_gru), bhh_f=u(ks[3], (1, 3 * H), k_gru),
        wih_b=u(ks[4], (E, 3 * H), k_gru), whh_b=u(ks[5], (H, 3 * H), k_gru),
        bih_b=u(ks[6], (1, 3 * H), k_gru), bhh_b=u(ks[7], (1, 3 * H), k_gru),
        # LayerNorm(2H)
        ln_g=jnp.ones((1, 2 * H), jnp.float32),
        ln_b=jnp.zeros((1, 2 * H), jnp.float32),
        # Linear(2H -> H)
        w1=u(ks[8], (2 * H, H), 1.0 / jnp.sqrt(2 * H)),
        b1=u(ks[9], (1, H), 1.0 / jnp.sqrt(2 * H)),
        # Linear(H -> H//2)
        w2=u(ks[10], (H, H // 2), 1.0 / jnp.sqrt(H)),
        b2=u(ks[11], (1, H // 2), 1.0 / jnp.sqrt(H)),
    )


def tower_two_reference(x, params):
    """Pure-JAX f32 reference mirroring the PyTorch forward (lengths=None)."""
    B, T, E = x.shape
    H = params["whh_f"].shape[0]

    def cell(x_t, h, wih, whh, bih, bhh):
        gi = x_t @ wih + bih
        gh = h @ whh + bhh
        r = jax.nn.sigmoid(gi[:, 0:H] + gh[:, 0:H])
        z = jax.nn.sigmoid(gi[:, H:2 * H] + gh[:, H:2 * H])
        n = jnp.tanh(gi[:, 2 * H:] + r * gh[:, 2 * H:])
        return (1.0 - z) * n + z * h

    h_f = jnp.zeros((B, H), jnp.float32)
    h_b = jnp.zeros((B, H), jnp.float32)
    for t in range(T):
        h_f = cell(x[:, t], h_f, params["wih_f"], params["whh_f"],
                   params["bih_f"], params["bhh_f"])
        h_b = cell(x[:, T - 1 - t], h_b, params["wih_b"], params["whh_b"],
                   params["bih_b"], params["bhh_b"])
    h_cat = jnp.concatenate([h_f, h_b], axis=1)
    mu = jnp.mean(h_cat, -1, keepdims=True)
    var = jnp.mean((h_cat - mu) ** 2, -1, keepdims=True)
    xn = (h_cat - mu) * lax.rsqrt(var + 1e-5) * params["ln_g"] + params["ln_b"]
    h1 = jnp.maximum(xn @ params["w1"] + params["b1"], 0.0)
    return h1 @ params["w2"] + params["b2"]


if __name__ == "__main__":
    B, T, E, H = 2, 8, 32, 32  # small shapes consistent with the module
    key = jax.random.PRNGKey(0)
    x = jax.random.normal(key, (B, T, E), jnp.float32)
    params = init_params(jax.random.PRNGKey(42), E, H)

    # One-time parameter repack (hoisted out of the per-call path).
    kp = jax.tree_util.tree_map(jax.block_until_ready,
                                prepare_kernel_params(params, E, H))

    fwd = jax.jit(tower_two_forward)
    out = jax.block_until_ready(fwd(x, kp))

    ref = tower_two_reference(x, params)
    assert out.shape == (B, H // 2)
    # bf16 MXU operands (f32 accumulation) -> compare against f32 reference
    # with a bf16-appropriate tolerance.
    assert jnp.allclose(out, ref, atol=5e-2, rtol=5e-2)
    print("KERNEL_OK")
</pallas_src>

<mosaic_0001>
module attributes {stable_mosaic.version = 11 : i64} {
  func.func @tower_two_kernel(%arg0: memref<64x64xbf16, #tpu.memory_space<vmem>>, %arg1: memref<64x384xbf16, #tpu.memory_space<vmem>>, %arg2: memref<1x384xf32, #tpu.memory_space<vmem>>, %arg3: memref<128x384xbf16, #tpu.memory_space<vmem>>, %arg4: memref<1x128xf32, #tpu.memory_space<vmem>>, %arg5: memref<1x64xf32, #tpu.memory_space<vmem>>, %arg6: memref<1x64xf32, #tpu.memory_space<vmem>>, %arg7: memref<64x32xbf16, #tpu.memory_space<vmem>>, %arg8: memref<1x32xf32, #tpu.memory_space<vmem>>, %arg9: memref<32x16xbf16, #tpu.memory_space<vmem>>, %arg10: memref<1x16xf32, #tpu.memory_space<vmem>>, %arg11: memref<8x16xf32, #tpu.memory_space<vmem>>) attributes {dimension_semantics = [], scalar_prefetch = 0 : i64, scratch_operands = 0 : i64, tpu.core_type = #tpu.core_type<tc>} {
    %c0 = arith.constant 0 : index
    %c0_0 = arith.constant 0 : index
    %0 = vector.load %arg0[%c0, %c0_0] : memref<64x64xbf16, #tpu.memory_space<vmem>>, vector<64x64xbf16>
    %c0_1 = arith.constant 0 : index
    %c0_2 = arith.constant 0 : index
    %1 = vector.load %arg1[%c0_1, %c0_2] : memref<64x384xbf16, #tpu.memory_space<vmem>>, vector<64x384xbf16>
    %cst = arith.constant dense<0.000000e+00> : vector<64x384xf32>
    %2 = tpu.matmul %0, %1, %cst {dimension_numbers = #tpu.dot_dimension_numbers<[1], [0], [0], [1], [0, 0, 1, 1], [], []>} : vector<64x64xbf16>, vector<64x384xbf16>, vector<64x384xf32> -> vector<64x384xf32>
    %c0_3 = arith.constant 0 : index
    %c0_4 = arith.constant 0 : index
    %3 = vector.load %arg2[%c0_3, %c0_4] : memref<1x384xf32, #tpu.memory_space<vmem>>, vector<1x384xf32>
    %4 = vector.broadcast %3 : vector<1x384xf32> to vector<64x384xf32>
    %5 = arith.addf %2, %4 : vector<64x384xf32>
    %c0_5 = arith.constant 0 : index
    %c0_6 = arith.constant 0 : index
    %6 = vector.load %arg3[%c0_5, %c0_6] : memref<128x384xbf16, #tpu.memory_space<vmem>>, vector<128x384xbf16>
    %c0_7 = arith.constant 0 : index
    %c0_8 = arith.constant 0 : index
    %7 = vector.load %arg4[%c0_7, %c0_8] : memref<1x128xf32, #tpu.memory_space<vmem>>, vector<1x128xf32>
    %cst_9 = arith.constant 0.000000e+00 : f32
    %8 = vector.broadcast %cst_9 : f32 to vector<8x128xf32>
    %9 = vector.extract_strided_slice %5 {offsets = [0, 0], sizes = [8, 384], strides = [1, 1]} : vector<64x384xf32> to vector<8x384xf32>
    %10 = arith.truncf %8 : vector<8x128xf32> to vector<8x128xbf16>
    %cst_10 = arith.constant dense<0.000000e+00> : vector<8x384xf32>
    %11 = tpu.matmul %10, %6, %cst_10 {dimension_numbers = #tpu.dot_dimension_numbers<[1], [0], [0], [1], [0, 0, 1, 1], [], []>} : vector<8x128xbf16>, vector<128x384xbf16>, vector<8x384xf32> -> vector<8x384xf32>
    %12 = vector.extract_strided_slice %9 {offsets = [0, 0], sizes = [8, 256], strides = [1, 1]} : vector<8x384xf32> to vector<8x256xf32>
    %13 = vector.extract_strided_slice %11 {offsets = [0, 0], sizes = [8, 256], strides = [1, 1]} : vector<8x384xf32> to vector<8x256xf32>
    %14 = arith.addf %12, %13 : vector<8x256xf32>
    %cst_11 = arith.constant 5.000000e-01 : f32
    %15 = vector.broadcast %cst_11 : f32 to vector<8x256xf32>
    %16 = arith.mulf %15, %14 : vector<8x256xf32>
    %17 = math.tanh %16 : vector<8x256xf32>
    %cst_12 = arith.constant 5.000000e-01 : f32
    %18 = vector.broadcast %cst_12 : f32 to vector<8x256xf32>
    %19 = arith.mulf %18, %17 : vector<8x256xf32>
    %cst_13 = arith.constant 5.000000e-01 : f32
    %20 = vector.broadcast %cst_13 : f32 to vector<8x256xf32>
    %21 = arith.addf %19, %20 : vector<8x256xf32>
    %22 = vector.extract_strided_slice %21 {offsets = [0, 0], sizes = [8, 128], strides = [1, 1]} : vector<8x256xf32> to vector<8x128xf32>
    %23 = vector.extract_strided_slice %21 {offsets = [0, 128], sizes = [8, 128], strides = [1, 1]} : vector<8x256xf32> to vector<8x128xf32>
    %24 = vector.extract_strided_slice %9 {offsets = [0, 256], sizes = [8, 128], strides = [1, 1]} : vector<8x384xf32> to vector<8x128xf32>
    %25 = vector.extract_strided_slice %11 {offsets = [0, 256], sizes = [8, 128], strides = [1, 1]} : vector<8x384xf32> to vector<8x128xf32>
    %26 = vector.broadcast %7 : vector<1x128xf32> to vector<8x128xf32>
    %27 = arith.addf %25, %26 : vector<8x128xf32>
    %28 = arith.mulf %22, %27 : vector<8x128xf32>
    %29 = arith.addf %24, %28 : vector<8x128xf32>
    %30 = math.tanh %29 : vector<8x128xf32>
    %cst_14 = arith.constant 1.000000e+00 : f32
    %31 = vector.broadcast %cst_14 : f32 to vector<8x128xf32>
    %32 = arith.subf %31, %23 : vector<8x128xf32>
    %33 = arith.mulf %32, %30 : vector<8x128xf32>
    %34 = arith.mulf %23, %8 : vector<8x128xf32>
    %35 = arith.addf %33, %34 : vector<8x128xf32>
    %36 = vector.extract_strided_slice %5 {offsets = [8, 0], sizes = [8, 384], strides = [1, 1]} : vector<64x384xf32> to vector<8x384xf32>
    %37 = arith.truncf %35 : vector<8x128xf32> to vector<8x128xbf16>
    %cst_15 = arith.constant dense<0.000000e+00> : vector<8x384xf32>
    %38 = tpu.matmul %37, %6, %cst_15 {dimension_numbers = #tpu.dot_dimension_numbers<[1], [0], [0], [1], [0, 0, 1, 1], [], []>} : vector<8x128xbf16>, vector<128x384xbf16>, vector<8x384xf32> -> vector<8x384xf32>
    %39 = vector.extract_strided_slice %36 {offsets = [0, 0], sizes = [8, 256], strides = [1, 1]} : vector<8x384xf32> to vector<8x256xf32>
    %40 = vector.extract_strided_slice %38 {offsets = [0, 0], sizes = [8, 256], strides = [1, 1]} : vector<8x384xf32> to vector<8x256xf32>
    %41 = arith.addf %39, %40 : vector<8x256xf32>
    %cst_16 = arith.constant 5.000000e-01 : f32
    %42 = vector.broadcast %cst_16 : f32 to vector<8x256xf32>
    %43 = arith.mulf %42, %41 : vector<8x256xf32>
    %44 = math.tanh %43 : vector<8x256xf32>
    %cst_17 = arith.constant 5.000000e-01 : f32
    %45 = vector.broadcast %cst_17 : f32 to vector<8x256xf32>
    %46 = arith.mulf %45, %44 : vector<8x256xf32>
    %cst_18 = arith.constant 5.000000e-01 : f32
    %47 = vector.broadcast %cst_18 : f32 to vector<8x256xf32>
    %48 = arith.addf %46, %47 : vector<8x256xf32>
    %49 = vector.extract_strided_slice %48 {offsets = [0, 0], sizes = [8, 128], strides = [1, 1]} : vector<8x256xf32> to vector<8x128xf32>
    %50 = vector.extract_strided_slice %48 {offsets = [0, 128], sizes = [8, 128], strides = [1, 1]} : vector<8x256xf32> to vector<8x128xf32>
    %51 = vector.extract_strided_slice %36 {offsets = [0, 256], sizes = [8, 128], strides = [1, 1]} : vector<8x384xf32> to vector<8x128xf32>
    %52 = vector.extract_strided_slice %38 {offsets = [0, 256], sizes = [8, 128], strides = [1, 1]} : vector<8x384xf32> to vector<8x128xf32>
    %53 = vector.broadcast %7 : vector<1x128xf32> to vector<8x128xf32>
    %54 = arith.addf %52, %53 : vector<8x128xf32>
    %55 = arith.mulf %49, %54 : vector<8x128xf32>
    %56 = arith.addf %51, %55 : vector<8x128xf32>
    %57 = math.tanh %56 : vector<8x128xf32>
    %cst_19 = arith.constant 1.000000e+00 : f32
    %58 = vector.broadcast %cst_19 : f32 to vector<8x128xf32>
    %59 = arith.subf %58, %50 : vector<8x128xf32>
    %60 = arith.mulf %59, %57 : vector<8x128xf32>
    %61 = arith.mulf %50, %35 : vector<8x128xf32>
    %62 = arith.addf %60, %61 : vector<8x128xf32>
    %63 = vector.extract_strided_slice %5 {offsets = [16, 0], sizes = [8, 384], strides = [1, 1]} : vector<64x384xf32> to vector<8x384xf32>
    %64 = arith.truncf %62 : vector<8x128xf32> to vector<8x128xbf16>
    %cst_20 = arith.constant dense<0.000000e+00> : vector<8x384xf32>
    %65 = tpu.matmul %64, %6, %cst_20 {dimension_numbers = #tpu.dot_dimension_numbers<[1], [0], [0], [1], [0, 0, 1, 1], [], []>} : vector<8x128xbf16>, vector<128x384xbf16>, vector<8x384xf32> -> vector<8x384xf32>
    %66 = vector.extract_strided_slice %63 {offsets = [0, 0], sizes = [8, 256], strides = [1, 1]} : vector<8x384xf32> to vector<8x256xf32>
    %67 = vector.extract_strided_slice %65 {offsets = [0, 0], sizes = [8, 256], strides = [1, 1]} : vector<8x384xf32> to vector<8x256xf32>
    %68 = arith.addf %66, %67 : vector<8x256xf32>
    %cst_21 = arith.constant 5.000000e-01 : f32
    %69 = vector.broadcast %cst_21 : f32 to vector<8x256xf32>
    %70 = arith.mulf %69, %68 : vector<8x256xf32>
    %71 = math.tanh %70 : vector<8x256xf32>
    %cst_22 = arith.constant 5.000000e-01 : f32
    %72 = vector.broadcast %cst_22 : f32 to vector<8x256xf32>
    %73 = arith.mulf %72, %71 : vector<8x256xf32>
    %cst_23 = arith.constant 5.000000e-01 : f32
    %74 = vector.broadcast %cst_23 : f32 to vector<8x256xf32>
    %75 = arith.addf %73, %74 : vector<8x256xf32>
    %76 = vector.extract_strided_slice %75 {offsets = [0, 0], sizes = [8, 128], strides = [1, 1]} : vector<8x256xf32> to vector<8x128xf32>
    %77 = vector.extract_strided_slice %75 {offsets = [0, 128], sizes = [8, 128], strides = [1, 1]} : vector<8x256xf32> to vector<8x128xf32>
    %78 = vector.extract_strided_slice %63 {offsets = [0, 256], sizes = [8, 128], strides = [1, 1]} : vector<8x384xf32> to vector<8x128xf32>
    %79 = vector.extract_strided_slice %65 {offsets = [0, 256], sizes = [8, 128], strides = [1, 1]} : vector<8x384xf32> to vector<8x128xf32>
    %80 = vector.broadcast %7 : vector<1x128xf32> to vector<8x128xf32>
    %81 = arith.addf %79, %80 : vector<8x128xf32>
    %82 = arith.mulf %76, %81 : vector<8x128xf32>
    %83 = arith.addf %78, %82 : vector<8x128xf32>
    %84 = math.tanh %83 : vector<8x128xf32>
    %cst_24 = arith.constant 1.000000e+00 : f32
    %85 = vector.broadcast %cst_24 : f32 to vector<8x128xf32>
    %86 = arith.subf %85, %77 : vector<8x128xf32>
    %87 = arith.mulf %86, %84 : vector<8x128xf32>
    %88 = arith.mulf %77, %62 : vector<8x128xf32>
    %89 = arith.addf %87, %88 : vector<8x128xf32>
    %90 = vector.extract_strided_slice %5 {offsets = [24, 0], sizes = [8, 384], strides = [1, 1]} : vector<64x384xf32> to vector<8x384xf32>
    %91 = arith.truncf %89 : vector<8x128xf32> to vector<8x128xbf16>
    %cst_25 = arith.constant dense<0.000000e+00> : vector<8x384xf32>
    %92 = tpu.matmul %91, %6, %cst_25 {dimension_numbers = #tpu.dot_dimension_numbers<[1], [0], [0], [1], [0, 0, 1, 1], [], []>} : vector<8x128xbf16>, vector<128x384xbf16>, vector<8x384xf32> -> vector<8x384xf32>
    %93 = vector.extract_strided_slice %90 {offsets = [0, 0], sizes = [8, 256], strides = [1, 1]} : vector<8x384xf32> to vector<8x256xf32>
    %94 = vector.extract_strided_slice %92 {offsets = [0, 0], sizes = [8, 256], strides = [1, 1]} : vector<8x384xf32> to vector<8x256xf32>
    %95 = arith.addf %93, %94 : vector<8x256xf32>
    %cst_26 = arith.constant 5.000000e-01 : f32
    %96 = vector.broadcast %cst_26 : f32 to vector<8x256xf32>
    %97 = arith.mulf %96, %95 : vector<8x256xf32>
    %98 = math.tanh %97 : vector<8x256xf32>
    %cst_27 = arith.constant 5.000000e-01 : f32
    %99 = vector.broadcast %cst_27 : f32 to vector<8x256xf32>
    %100 = arith.mulf %99, %98 : vector<8x256xf32>
    %cst_28 = arith.constant 5.000000e-01 : f32
    %101 = vector.broadcast %cst_28 : f32 to vector<8x256xf32>
    %102 = arith.addf %100, %101 : vector<8x256xf32>
    %103 = vector.extract_strided_slice %102 {offsets = [0, 0], sizes = [8, 128], strides = [1, 1]} : vector<8x256xf32> to vector<8x128xf32>
    %104 = vector.extract_strided_slice %102 {offsets = [0, 128], sizes = [8, 128], strides = [1, 1]} : vector<8x256xf32> to vector<8x128xf32>
    %105 = vector.extract_strided_slice %90 {offsets = [0, 256], sizes = [8, 128], strides = [1, 1]} : vector<8x384xf32> to vector<8x128xf32>
    %106 = vector.extract_strided_slice %92 {offsets = [0, 256], sizes = [8, 128], strides = [1, 1]} : vector<8x384xf32> to vector<8x128xf32>
    %107 = vector.broadcast %7 : vector<1x128xf32> to vector<8x128xf32>
    %108 = arith.addf %106, %107 : vector<8x128xf32>
    %109 = arith.mulf %103, %108 : vector<8x128xf32>
    %110 = arith.addf %105, %109 : vector<8x128xf32>
    %111 = math.tanh %110 : vector<8x128xf32>
    %cst_29 = arith.constant 1.000000e+00 : f32
    %112 = vector.broadcast %cst_29 : f32 to vector<8x128xf32>
    %113 = arith.subf %112, %104 : vector<8x128xf32>
    %114 = arith.mulf %113, %111 : vector<8x128xf32>
    %115 = arith.mulf %104, %89 : vector<8x128xf32>
    %116 = arith.addf %114, %115 : vector<8x128xf32>
    %117 = vector.extract_strided_slice %5 {offsets = [32, 0], sizes = [8, 384], strides = [1, 1]} : vector<64x384xf32> to vector<8x384xf32>
    %118 = arith.truncf %116 : vector<8x128xf32> to vector<8x128xbf16>
    %cst_30 = arith.constant dense<0.000000e+00> : vector<8x384xf32>
    %119 = tpu.matmul %118, %6, %cst_30 {dimension_numbers = #tpu.dot_dimension_numbers<[1], [0], [0], [1], [0, 0, 1, 1], [], []>} : vector<8x128xbf16>, vector<128x384xbf16>, vector<8x384xf32> -> vector<8x384xf32>
    %120 = vector.extract_strided_slice %117 {offsets = [0, 0], sizes = [8, 256], strides = [1, 1]} : vector<8x384xf32> to vector<8x256xf32>
    %121 = vector.extract_strided_slice %119 {offsets = [0, 0], sizes = [8, 256], strides = [1, 1]} : vector<8x384xf32> to vector<8x256xf32>
    %122 = arith.addf %120, %121 : vector<8x256xf32>
    %cst_31 = arith.constant 5.000000e-01 : f32
    %123 = vector.broadcast %cst_31 : f32 to vector<8x256xf32>
    %124 = arith.mulf %123, %122 : vector<8x256xf32>
    %125 = math.tanh %124 : vector<8x256xf32>
    %cst_32 = arith.constant 5.000000e-01 : f32
    %126 = vector.broadcast %cst_32 : f32 to vector<8x256xf32>
    %127 = arith.mulf %126, %125 : vector<8x256xf32>
    %cst_33 = arith.constant 5.000000e-01 : f32
    %128 = vector.broadcast %cst_33 : f32 to vector<8x256xf32>
    %129 = arith.addf %127, %128 : vector<8x256xf32>
    %130 = vector.extract_strided_slice %129 {offsets = [0, 0], sizes = [8, 128], strides = [1, 1]} : vector<8x256xf32> to vector<8x128xf32>
    %131 = vector.extract_strided_slice %129 {offsets = [0, 128], sizes = [8, 128], strides = [1, 1]} : vector<8x256xf32> to vector<8x128xf32>
    %132 = vector.extract_strided_slice %117 {offsets = [0, 256], sizes = [8, 128], strides = [1, 1]} : vector<8x384xf32> to vector<8x128xf32>
    %133 = vector.extract_strided_slice %119 {offsets = [0, 256], sizes = [8, 128], strides = [1, 1]} : vector<8x384xf32> to vector<8x128xf32>
    %134 = vector.broadcast %7 : vector<1x128xf32> to vector<8x128xf32>
    %135 = arith.addf %133, %134 : vector<8x128xf32>
    %136 = arith.mulf %130, %135 : vector<8x128xf32>
    %137 = arith.addf %132, %136 : vector<8x128xf32>
    %138 = math.tanh %137 : vector<8x128xf32>
    %cst_34 = arith.constant 1.000000e+00 : f32
    %139 = vector.broadcast %cst_34 : f32 to vector<8x128xf32>
    %140 = arith.subf %139, %131 : vector<8x128xf32>
    %141 = arith.mulf %140, %138 : vector<8x128xf32>
    %142 = arith.mulf %131, %116 : vector<8x128xf32>
    %143 = arith.addf %141, %142 : vector<8x128xf32>
    %144 = vector.extract_strided_slice %5 {offsets = [40, 0], sizes = [8, 384], strides = [1, 1]} : vector<64x384xf32> to vector<8x384xf32>
    %145 = arith.truncf %143 : vector<8x128xf32> to vector<8x128xbf16>
    %cst_35 = arith.constant dense<0.000000e+00> : vector<8x384xf32>
    %146 = tpu.matmul %145, %6, %cst_35 {dimension_numbers = #tpu.dot_dimension_numbers<[1], [0], [0], [1], [0, 0, 1, 1], [], []>} : vector<8x128xbf16>, vector<128x384xbf16>, vector<8x384xf32> -> vector<8x384xf32>
    %147 = vector.extract_strided_slice %144 {offsets = [0, 0], sizes = [8, 256], strides = [1, 1]} : vector<8x384xf32> to vector<8x256xf32>
    %148 = vector.extract_strided_slice %146 {offsets = [0, 0], sizes = [8, 256], strides = [1, 1]} : vector<8x384xf32> to vector<8x256xf32>
    %149 = arith.addf %147, %148 : vector<8x256xf32>
    %cst_36 = arith.constant 5.000000e-01 : f32
    %150 = vector.broadcast %cst_36 : f32 to vector<8x256xf32>
    %151 = arith.mulf %150, %149 : vector<8x256xf32>
    %152 = math.tanh %151 : vector<8x256xf32>
    %cst_37 = arith.constant 5.000000e-01 : f32
    %153 = vector.broadcast %cst_37 : f32 to vector<8x256xf32>
    %154 = arith.mulf %153, %152 : vector<8x256xf32>
    %cst_38 = arith.constant 5.000000e-01 : f32
    %155 = vector.broadcast %cst_38 : f32 to vector<8x256xf32>
    %156 = arith.addf %154, %155 : vector<8x256xf32>
    %157 = vector.extract_strided_slice %156 {offsets = [0, 0], sizes = [8, 128], strides = [1, 1]} : vector<8x256xf32> to vector<8x128xf32>
    %158 = vector.extract_strided_slice %156 {offsets = [0, 128], sizes = [8, 128], strides = [1, 1]} : vector<8x256xf32> to vector<8x128xf32>
    %159 = vector.extract_strided_slice %144 {offsets = [0, 256], sizes = [8, 128], strides = [1, 1]} : vector<8x384xf32> to vector<8x128xf32>
    %160 = vector.extract_strided_slice %146 {offsets = [0, 256], sizes = [8, 128], strides = [1, 1]} : vector<8x384xf32> to vector<8x128xf32>
    %161 = vector.broadcast %7 : vector<1x128xf32> to vector<8x128xf32>
    %162 = arith.addf %160, %161 : vector<8x128xf32>
    %163 = arith.mulf %157, %162 : vector<8x128xf32>
    %164 = arith.addf %159, %163 : vector<8x128xf32>
    %165 = math.tanh %164 : vector<8x128xf32>
    %cst_39 = arith.constant 1.000000e+00 : f32
    %166 = vector.broadcast %cst_39 : f32 to vector<8x128xf32>
    %167 = arith.subf %166, %158 : vector<8x128xf32>
    %168 = arith.mulf %167, %165 : vector<8x128xf32>
    %169 = arith.mulf %158, %143 : vector<8x128xf32>
    %170 = arith.addf %168, %169 : vector<8x128xf32>
    %171 = vector.extract_strided_slice %5 {offsets = [48, 0], sizes = [8, 384], strides = [1, 1]} : vector<64x384xf32> to vector<8x384xf32>
    %172 = arith.truncf %170 : vector<8x128xf32> to vector<8x128xbf16>
    %cst_40 = arith.constant dense<0.000000e+00> : vector<8x384xf32>
    %173 = tpu.matmul %172, %6, %cst_40 {dimension_numbers = #tpu.dot_dimension_numbers<[1], [0], [0], [1], [0, 0, 1, 1], [], []>} : vector<8x128xbf16>, vector<128x384xbf16>, vector<8x384xf32> -> vector<8x384xf32>
    %174 = vector.extract_strided_slice %171 {offsets = [0, 0], sizes = [8, 256], strides = [1, 1]} : vector<8x384xf32> to vector<8x256xf32>
    %175 = vector.extract_strided_slice %173 {offsets = [0, 0], sizes = [8, 256], strides = [1, 1]} : vector<8x384xf32> to vector<8x256xf32>
    %176 = arith.addf %174, %175 : vector<8x256xf32>
    %cst_41 = arith.constant 5.000000e-01 : f32
    %177 = vector.broadcast %cst_41 : f32 to vector<8x256xf32>
    %178 = arith.mulf %177, %176 : vector<8x256xf32>
    %179 = math.tanh %178 : vector<8x256xf32>
    %cst_42 = arith.constant 5.000000e-01 : f32
    %180 = vector.broadcast %cst_42 : f32 to vector<8x256xf32>
    %181 = arith.mulf %180, %179 : vector<8x256xf32>
    %cst_43 = arith.constant 5.000000e-01 : f32
    %182 = vector.broadcast %cst_43 : f32 to vector<8x256xf32>
    %183 = arith.addf %181, %182 : vector<8x256xf32>
    %184 = vector.extract_strided_slice %183 {offsets = [0, 0], sizes = [8, 128], strides = [1, 1]} : vector<8x256xf32> to vector<8x128xf32>
    %185 = vector.extract_strided_slice %183 {offsets = [0, 128], sizes = [8, 128], strides = [1, 1]} : vector<8x256xf32> to vector<8x128xf32>
    %186 = vector.extract_strided_slice %171 {offsets = [0, 256], sizes = [8, 128], strides = [1, 1]} : vector<8x384xf32> to vector<8x128xf32>
    %187 = vector.extract_strided_slice %173 {offsets = [0, 256], sizes = [8, 128], strides = [1, 1]} : vector<8x384xf32> to vector<8x128xf32>
    %188 = vector.broadcast %7 : vector<1x128xf32> to vector<8x128xf32>
    %189 = arith.addf %187, %188 : vector<8x128xf32>
    %190 = arith.mulf %184, %189 : vector<8x128xf32>
    %191 = arith.addf %186, %190 : vector<8x128xf32>
    %192 = math.tanh %191 : vector<8x128xf32>
    %cst_44 = arith.constant 1.000000e+00 : f32
    %193 = vector.broadcast %cst_44 : f32 to vector<8x128xf32>
    %194 = arith.subf %193, %185 : vector<8x128xf32>
    %195 = arith.mulf %194, %192 : vector<8x128xf32>
    %196 = arith.mulf %185, %170 : vector<8x128xf32>
    %197 = arith.addf %195, %196 : vector<8x128xf32>
    %198 = vector.extract_strided_slice %5 {offsets = [56, 0], sizes = [8, 384], strides = [1, 1]} : vector<64x384xf32> to vector<8x384xf32>
    %199 = arith.truncf %197 : vector<8x128xf32> to vector<8x128xbf16>
    %cst_45 = arith.constant dense<0.000000e+00> : vector<8x384xf32>
    %200 = tpu.matmul %199, %6, %cst_45 {dimension_numbers = #tpu.dot_dimension_numbers<[1], [0], [0], [1], [0, 0, 1, 1], [], []>} : vector<8x128xbf16>, vector<128x384xbf16>, vector<8x384xf32> -> vector<8x384xf32>
    %201 = vector.extract_strided_slice %198 {offsets = [0, 0], sizes = [8, 256], strides = [1, 1]} : vector<8x384xf32> to vector<8x256xf32>
    %202 = vector.extract_strided_slice %200 {offsets = [0, 0], sizes = [8, 256], strides = [1, 1]} : vector<8x384xf32> to vector<8x256xf32>
    %203 = arith.addf %201, %202 : vector<8x256xf32>
    %cst_46 = arith.constant 5.000000e-01 : f32
    %204 = vector.broadcast %cst_46 : f32 to vector<8x256xf32>
    %205 = arith.mulf %204, %203 : vector<8x256xf32>
    %206 = math.tanh %205 : vector<8x256xf32>
    %cst_47 = arith.constant 5.000000e-01 : f32
    %207 = vector.broadcast %cst_47 : f32 to vector<8x256xf32>
    %208 = arith.mulf %207, %206 : vector<8x256xf32>
    %cst_48 = arith.constant 5.000000e-01 : f32
    %209 = vector.broadcast %cst_48 : f32 to vector<8x256xf32>
    %210 = arith.addf %208, %209 : vector<8x256xf32>
    %211 = vector.extract_strided_slice %210 {offsets = [0, 0], sizes = [8, 128], strides = [1, 1]} : vector<8x256xf32> to vector<8x128xf32>
    %212 = vector.extract_strided_slice %210 {offsets = [0, 128], sizes = [8, 128], strides = [1, 1]} : vector<8x256xf32> to vector<8x128xf32>
    %213 = vector.extract_strided_slice %198 {offsets = [0, 256], sizes = [8, 128], strides = [1, 1]} : vector<8x384xf32> to vector<8x128xf32>
    %214 = vector.extract_strided_slice %200 {offsets = [0, 256], sizes = [8, 128], strides = [1, 1]} : vector<8x384xf32> to vector<8x128xf32>
    %215 = vector.broadcast %7 : vector<1x128xf32> to vector<8x128xf32>
    %216 = arith.addf %214, %215 : vector<8x128xf32>
    %217 = arith.mulf %211, %216 : vector<8x128xf32>
    %218 = arith.addf %213, %217 : vector<8x128xf32>
    %219 = math.tanh %218 : vector<8x128xf32>
    %cst_49 = arith.constant 1.000000e+00 : f32
    %220 = vector.broadcast %cst_49 : f32 to vector<8x128xf32>
    %221 = arith.subf %220, %212 : vector<8x128xf32>
    %222 = arith.mulf %221, %219 : vector<8x128xf32>
    %223 = arith.mulf %212, %197 : vector<8x128xf32>
    %224 = arith.addf %222, %223 : vector<8x128xf32>
    %225 = vector.extract_strided_slice %224 {offsets = [0, 0], sizes = [8, 64], strides = [1, 1]} : vector<8x128xf32> to vector<8x64xf32>
    %cst_50 = arith.constant dense<0.000000e+00> : vector<8xf32>
    %226 = vector.multi_reduction <add>, %225, %cst_50 [1] : vector<8x64xf32> to vector<8xf32>
    %227 = vector.shape_cast %226 : vector<8xf32> to vector<8x1xf32>
    %cst_51 = arith.constant 6.400000e+01 : f32
    %228 = vector.broadcast %cst_51 : f32 to vector<8x1xf32>
    %229 = arith.divf %227, %228 : vector<8x1xf32>
    %230 = vector.broadcast %229 : vector<8x1xf32> to vector<8x64xf32>
    %231 = arith.subf %225, %230 : vector<8x64xf32>
    %232 = arith.mulf %231, %231 : vector<8x64xf32>
    %cst_52 = arith.constant dense<0.000000e+00> : vector<8xf32>
    %233 = vector.multi_reduction <add>, %232, %cst_52 [1] : vector<8x64xf32> to vector<8xf32>
    %234 = vector.shape_cast %233 : vector<8xf32> to vector<8x1xf32>
    %cst_53 = arith.constant 6.400000e+01 : f32
    %235 = vector.broadcast %cst_53 : f32 to vector<8x1xf32>
    %236 = arith.divf %234, %235 : vector<8x1xf32>
    %237 = vector.broadcast %229 : vector<8x1xf32> to vector<8x64xf32>
    %238 = arith.subf %225, %237 : vector<8x64xf32>
    %cst_54 = arith.constant 9.99999974E-6 : f32
    %239 = vector.broadcast %cst_54 : f32 to vector<8x1xf32>
    %240 = arith.addf %236, %239 : vector<8x1xf32>
    %241 = math.rsqrt %240 : vector<8x1xf32>
    %242 = vector.broadcast %241 : vector<8x1xf32> to vector<8x64xf32>
    %243 = arith.mulf %238, %242 : vector<8x64xf32>
    %c0_55 = arith.constant 0 : index
    %c0_56 = arith.constant 0 : index
    %244 = vector.load %arg5[%c0_55, %c0_56] : memref<1x64xf32, #tpu.memory_space<vmem>>, vector<1x64xf32>
    %245 = vector.broadcast %244 : vector<1x64xf32> to vector<8x64xf32>
    %246 = arith.mulf %243, %245 : vector<8x64xf32>
    %c0_57 = arith.constant 0 : index
    %c0_58 = arith.constant 0 : index
    %247 = vector.load %arg6[%c0_57, %c0_58] : memref<1x64xf32, #tpu.memory_space<vmem>>, vector<1x64xf32>
    %248 = vector.broadcast %247 : vector<1x64xf32> to vector<8x64xf32>
    %249 = arith.addf %246, %248 : vector<8x64xf32>
    %250 = arith.truncf %249 : vector<8x64xf32> to vector<8x64xbf16>
    %c0_59 = arith.constant 0 : index
    %c0_60 = arith.constant 0 : index
    %251 = vector.load %arg7[%c0_59, %c0_60] : memref<64x32xbf16, #tpu.memory_space<vmem>>, vector<64x32xbf16>
    %cst_61 = arith.constant dense<0.000000e+00> : vector<8x32xf32>
    %252 = tpu.matmul %250, %251, %cst_61 {dimension_numbers = #tpu.dot_dimension_numbers<[1], [0], [0], [1], [0, 0, 1, 1], [], []>} : vector<8x64xbf16>, vector<64x32xbf16>, vector<8x32xf32> -> vector<8x32xf32>
    %c0_62 = arith.constant 0 : index
    %c0_63 = arith.constant 0 : index
    %253 = vector.load %arg8[%c0_62, %c0_63] : memref<1x32xf32, #tpu.memory_space<vmem>>, vector<1x32xf32>
    %254 = vector.broadcast %253 : vector<1x32xf32> to vector<8x32xf32>
    %255 = arith.addf %252, %254 : vector<8x32xf32>
    %cst_64 = arith.constant 0.000000e+00 : f32
    %256 = vector.broadcast %cst_64 : f32 to vector<8x32xf32>
    %257 = arith.maximumf %255, %256 : vector<8x32xf32>
    %258 = arith.truncf %257 : vector<8x32xf32> to vector<8x32xbf16>
    %c0_65 = arith.constant 0 : index
    %c0_66 = arith.constant 0 : index
    %259 = vector.load %arg9[%c0_65, %c0_66] : memref<32x16xbf16, #tpu.memory_space<vmem>>, vector<32x16xbf16>
    %cst_67 = arith.constant dense<0.000000e+00> : vector<8x16xf32>
    %260 = tpu.matmul %258, %259, %cst_67 {dimension_numbers = #tpu.dot_dimension_numbers<[1], [0], [0], [1], [0, 0, 1, 1], [], []>} : vector<8x32xbf16>, vector<32x16xbf16>, vector<8x16xf32> -> vector<8x16xf32>
    %c0_68 = arith.constant 0 : index
    %c0_69 = arith.constant 0 : index
    %261 = vector.load %arg10[%c0_68, %c0_69] : memref<1x16xf32, #tpu.memory_space<vmem>>, vector<1x16xf32>
    %262 = vector.broadcast %261 : vector<1x16xf32> to vector<8x16xf32>
    %263 = arith.addf %260, %262 : vector<8x16xf32>
    %c0_70 = arith.constant 0 : index
    %c0_71 = arith.constant 0 : index
    %264 = vector.load %arg11[%c0_70, %c0_71] : memref<8x16xf32, #tpu.memory_space<vmem>>, vector<8x16xf32>
    tpu.vector_store %arg11[%c0_70, %c0_71], %263 {strides = array<i32>} : memref<8x16xf32, #tpu.memory_space<vmem>>, vector<8x16xf32>,
    return
  }
}

</mosaic_0001>

<llo_original>
// kernel: tower_two_forward.1
$region0: #{tower_two_forward.1}
  #allocation0 [shape = 'u32[]', space=smem, size = 0x4, offset = 0x4, fixed_abs, tag = 'smem constant byte address 0x4 - core index']
  #allocation1 [shape = 'u32[72,128]{1,0:T(1,128)}', space=vmem, size = 0x9000, scoped, tag = 'internal scratch']
  %s0 = inlined_call_operand.vmem [shape: bf16[64,64], index: 0, kind: input, shape index: {}]
  %s1 = inlined_call_operand.hbm [shape: bf16[64,384], index: 1, kind: input, shape index: {}]
  %s2 = inlined_call_operand.vmem [shape: f32[1,384], index: 2, kind: input, shape index: {}]
  %s3 = inlined_call_operand.hbm [shape: bf16[128,384], index: 3, kind: input, shape index: {}]
  %s4 = inlined_call_operand.vmem [shape: f32[1,128], index: 4, kind: input, shape index: {}]
  %s5 = inlined_call_operand.vmem [shape: f32[1,64], index: 5, kind: input, shape index: {}]
  %s6 = inlined_call_operand.vmem [shape: f32[1,64], index: 6, kind: input, shape index: {}]
  %s7 = inlined_call_operand.vmem [shape: bf16[64,32], index: 7, kind: input, shape index: {}]
  %s8 = inlined_call_operand.vmem [shape: f32[1,32], index: 8, kind: input, shape index: {}]
  %s9 = inlined_call_operand.vmem [shape: bf16[32,16], index: 9, kind: input, shape index: {}]
  %s10 = inlined_call_operand.vmem [shape: f32[1,16], index: 10, kind: input, shape index: {}]
  %s11 = inlined_call_operand.vmem [shape: f32[8,16], index: 11, kind: output, shape index: {}]
  %s12 = sld [smem:[#allocation0]]
  $region62: #{tower_two_forward.1} parent=0
    _
  %s14 = ssub.s32 1, %s12
  %s15 = scalar_select 0, %s14, %s12
  $region1: #{tower_two_forward.1} parent=0
    #allocation2 [shape = 'u8[49152]{0}', space=vmem, size = 0xc000, scoped, tag = 'input window, operand 1, single buffered']
    #allocation3 [shape = 's32[1]{0}', space=sflag, size = 0x4, scoped, tag = 'scoped memory for tower_two_forward.1']
    #allocation4 [shape = 'u8[98304]{0}', space=vmem, size = 0x18000, scoped, tag = 'input window, operand 3, single buffered']
    #allocation5 [shape = 's32[1]{0}', space=sflag, size = 0x4, scoped, tag = 'scoped memory for tower_two_forward.1']
    %16 = vsyncpa [#allocation3], 0
    %17 = vsyncpa [#allocation5], 0
    // Predicated region
    $region2: #{tower_two_forward.1} parent=1 // pred_check
      _
    $region3: #{tower_two_forward.1} parent=1 // pred_check_branch
      %19 = sbr.rel (0) target = $region5
    $region4: #{tower_two_forward.1} parent=1 // pred_region
      _
    $region5: #{tower_two_forward.1} parent=1 // pred_fallthru
      _
    // Predicated region
    $region6: #{tower_two_forward.1} parent=1 // pred_check
      _
    $region7: #{tower_two_forward.1} parent=1 // pred_check_branch
      %21 = sbr.rel (0) target = $region9
    $region8: #{tower_two_forward.1} parent=1 // pred_region
      %23 = vsyncadd [#allocation3], 0
      %s24 = sshll.u32 %s1, 4
      %s25 = int_to_ptr.hbm [resolvable:$true] %s24
      %s26 = sshll.u32 [#allocation2], 4
      %s27 = int_to_ptr.vmem [resolvable:$true] %s26
      %32 = dma.hbm_to_vmem [thread:$0]  %s25, 1536, %s27, [#allocation3], 192, 192, 12
    $region9: #{tower_two_forward.1} parent=1 // pred_fallthru
      _
    // Predicated region
    $region10: #{tower_two_forward.1} parent=1 // pred_check
      _
    $region11: #{tower_two_forward.1} parent=1 // pred_check_branch
      %34 = sbr.rel (0) target = $region13
    $region12: #{tower_two_forward.1} parent=1 // pred_region
      _
    $region13: #{tower_two_forward.1} parent=1 // pred_fallthru
      _
    // Predicated region
    $region14: #{tower_two_forward.1} parent=1 // pred_check
      _
    $region15: #{tower_two_forward.1} parent=1 // pred_check_branch
      %36 = sbr.rel (0) target = $region17
    $region16: #{tower_two_forward.1} parent=1 // pred_region
      %38 = vsyncadd [#allocation5], 0
      %s39 = sshll.u32 %s3, 4
      %s40 = int_to_ptr.hbm [resolvable:$true] %s39
      %s41 = sshll.u32 [#allocation4], 4
      %s42 = int_to_ptr.vmem [resolvable:$true] %s41
      %47 = dma.hbm_to_vmem [thread:$0]  %s40, 3072, %s42, [#allocation5], 192, 192, 12
    $region17: #{tower_two_forward.1} parent=1 // pred_fallthru
      _
    // Predicated region
    $region18: #{tower_two_forward.1} parent=1 // pred_check
      _
    $region19: #{tower_two_forward.1} parent=1 // pred_check_branch
      %49 = sbr.rel (0) target = $region21
    $region20: #{tower_two_forward.1} parent=1 // pred_region
      _
    $region21: #{tower_two_forward.1} parent=1 // pred_fallthru
      _
    // Predicated region
    $region22: #{tower_two_forward.1} parent=1 // pred_check
      _
    $region23: #{tower_two_forward.1} parent=1 // pred_check_branch
      %51 = sbr.rel (0) target = $region25
    $region24: #{tower_two_forward.1} parent=1 // pred_region
      _
    $region25: #{tower_two_forward.1} parent=1 // pred_fallthru
      _
    // Predicated region
    $region26: #{tower_two_forward.1} parent=1 // pred_check
      _
    $region27: #{tower_two_forward.1} parent=1 // pred_check_branch
      %53 = sbr.rel (0) target = $region29
    $region28: #{tower_two_forward.1} parent=1 // pred_region
      _
    $region29: #{tower_two_forward.1} parent=1 // pred_fallthru
      _
    // Predicated region
    $region30: #{tower_two_forward.1} parent=1 // pred_check
      _
    $region31: #{tower_two_forward.1} parent=1 // pred_check_branch
      %55 = sbr.rel (0) target = $region33
    $region32: #{tower_two_forward.1} parent=1 // pred_region
      _
    $region33: #{tower_two_forward.1} parent=1 // pred_fallthru
      _
    // Predicated region
    $region34: #{tower_two_forward.1} parent=1 // pred_check
      _
    $region35: #{tower_two_forward.1} parent=1 // pred_check_branch
      %57 = sbr.rel (0) target = $region37
    $region36: #{tower_two_forward.1} parent=1 // pred_region
      _
    $region37: #{tower_two_forward.1} parent=1 // pred_fallthru
      _
    // Predicated region
    $region38: #{tower_two_forward.1} parent=1 // pred_check
      _
    $region39: #{tower_two_forward.1} parent=1 // pred_check_branch
      %59 = sbr.rel (0) target = $region41
    $region40: #{tower_two_forward.1} parent=1 // pred_region
      _
    $region41: #{tower_two_forward.1} parent=1 // pred_fallthru
      _
    // Predicated region
    $region42: #{tower_two_forward.1} parent=1 // pred_check
      _
    $region43: #{tower_two_forward.1} parent=1 // pred_check_branch
      %61 = sbr.rel (0) target = $region45
    $region44: #{tower_two_forward.1} parent=1 // pred_region
      _
    $region45: #{tower_two_forward.1} parent=1 // pred_fallthru
      _
    // Predicated region
    $region46: #{tower_two_forward.1} parent=1 // pred_check
      _
    $region47: #{tower_two_forward.1} parent=1 // pred_check_branch
      %63 = sbr.rel (0) target = $region49
    $region48: #{tower_two_forward.1} parent=1 // pred_region
      %65 = dma.done [#allocation3], 1536
    $region49: #{tower_two_forward.1} parent=1 // pred_fallthru
      _
    // Predicated region
    $region50: #{tower_two_forward.1} parent=1 // pred_check
      _
    $region51: #{tower_two_forward.1} parent=1 // pred_check_branch
      %67 = sbr.rel (0) target = $region53
    $region52: #{tower_two_forward.1} parent=1 // pred_region
      %69 = dma.done [#allocation5], 3072
    $region53: #{tower_two_forward.1} parent=1 // pred_fallthru
      _
    %v71 = vld [vmem:[%s0] sm:$0xf]
    %v72 = vld [vmem:[%s0 + $0x4] sm:$0xf]
    %v73 = vld [vmem:[%s0 + $0x8] sm:$0xf]
    %v74 = vld [vmem:[%s0 + $0xc] sm:$0xf]
    %v75 = vld [vmem:[%s0 + $0x10] sm:$0xf]
    %v76 = vld [vmem:[%s0 + $0x14] sm:$0xf]
    %v77 = vld [vmem:[%s0 + $0x18] sm:$0xf]
    %v78 = vld [vmem:[%s0 + $0x1c] sm:$0xf]
    %v79 = vld [vmem:[#allocation2] sm:$0xff]
    %v80 = vld [vmem:[#allocation2 + $0x8] sm:$0xf]
    %v81 = vld [vmem:[#allocation2 + $0xc] sm:$0xff]
    %v82 = vld [vmem:[#allocation2 + $0x14] sm:$0xf]
    %v83 = vld [vmem:[#allocation2 + $0x18] sm:$0xff]
    %v84 = vld [vmem:[#allocation2 + $0x20] sm:$0xf]
    %v85 = vld [vmem:[#allocation2 + $0x24] sm:$0xff]
    %v86 = vld [vmem:[#allocation2 + $0x2c] sm:$0xf]
    %v87 = vld [vmem:[#allocation2 + $0x30] sm:$0xff]
    %v88 = vld [vmem:[#allocation2 + $0x38] sm:$0xf]
    %v89 = vld [vmem:[#allocation2 + $0x3c] sm:$0xff]
    %v90 = vld [vmem:[#allocation2 + $0x44] sm:$0xf]
    %v91 = vld [vmem:[#allocation2 + $0x48] sm:$0xff]
    %v92 = vld [vmem:[#allocation2 + $0x50] sm:$0xf]
    %v93 = vld [vmem:[#allocation2 + $0x54] sm:$0xff]
    %v94 = vld [vmem:[#allocation2 + $0x5c] sm:$0xf]
    %v95 = vld [vmem:[%s2] sm:$0x7]
    %v97 = vperm.slane %v95, 0
    %v98 = vperm.slane %v95, 1
    %v99 = vperm.slane %v95, 2
    %v111 = vunpack.c.l.b16 %v71
    %v112 = vunpack.c.l.b16 %v72
    %v113 = vunpack.c.l.b16 %v73
    %v114 = vunpack.c.l.b16 %v74
    %v115 = vunpack.c.l.b16 %v75
    %v116 = vunpack.c.l.b16 %v76
    %v117 = vunpack.c.l.b16 %v77
    %v118 = vunpack.c.l.b16 %v78
    %v119 = vpack.c.b16 %v112, %v111
    %v120 = vpack.c.b16 %v114, %v113
    %v121 = vpack.c.b16 %v116, %v115
    %v122 = vpack.c.b16 %v118, %v117
    %v139 = vunpack.c.l.b16 %v79
    %v140 = vunpack.c.h.b16 %v79
    %v141 = vunpack.c.l.b16 %v80
    %v142 = vunpack.c.l.b16 %v81
    %v143 = vunpack.c.h.b16 %v81
    %v144 = vunpack.c.l.b16 %v82
    %v145 = vunpack.c.l.b16 %v83
    %v146 = vunpack.c.h.b16 %v83
    %v147 = vunpack.c.l.b16 %v84
    %v148 = vunpack.c.l.b16 %v85
    %v149 = vunpack.c.h.b16 %v85
    %v150 = vunpack.c.l.b16 %v86
    %v151 = vunpack.c.l.b16 %v87
    %v152 = vunpack.c.h.b16 %v87
    %v153 = vunpack.c.l.b16 %v88
    %v154 = vunpack.c.l.b16 %v89
    %v155 = vunpack.c.h.b16 %v89
    %v156 = vunpack.c.l.b16 %v90
    %v157 = vunpack.c.l.b16 %v91
    %v158 = vunpack.c.h.b16 %v91
    %v159 = vunpack.c.l.b16 %v92
    %v160 = vunpack.c.l.b16 %v93
    %v161 = vunpack.c.h.b16 %v93
    %v162 = vunpack.c.l.b16 %v94
    %v163 = vpack.c.b16 %v142, %v139
    %v164 = vpack.c.b16 %v143, %v140
    %v165 = vpack.c.b16 %v144, %v141
    %v166 = vpack.c.b16 %v148, %v145
    %v167 = vpack.c.b16 %v149, %v146
    %v168 = vpack.c.b16 %v150, %v147
    %v169 = vpack.c.b16 %v154, %v151
    %v170 = vpack.c.b16 %v155, %v152
    %v171 = vpack.c.b16 %v156, %v153
    %v172 = vpack.c.b16 %v160, %v157
    %v173 = vpack.c.b16 %v161, %v158
    %v174 = vpack.c.b16 %v162, %v159
    %vm187 = vcmask 523264
    %v189 = vsel %vm187, %v119, 0
    %v192 = vsel %vm187, %v120, 0
    %v195 = vsel %vm187, %v121, 0
    %v198 = vsel %vm187, %v122, 0
    %200 = vmatpush.bf16.msra.mxu0 0
    %201 = vmatpush.bf16.msra.mxu0 0
    %202 = vmatpush.bf16.msra.mxu0 0
    %203 = vmatpush.bf16.msra.mxu0 0
    %204 = vmatpush.bf16.msra.mxu0 %v172
    %205 = vmatpush.bf16.msra.mxu0 %v169
    %206 = vmatpush.bf16.msra.mxu0 %v166
    %207 = vmatpush.bf16.msra.mxu0 %v163
    %208 = vmatmul.bf16.gmra.mxu0 %v189
    %v209 = vpop.f32.mrf.mxu0
    %v210 = vadd.f32 %v97, %v209
    %v211 = vpop.f32.mrf.mxu0
    %v212 = vadd.f32 %v97, %v211
    %213 = vmatmul.bf16.gmra.mxu0 %v192
    %v214 = vpop.f32.mrf.mxu0
    %v215 = vadd.f32 %v97, %v214
    %v216 = vpop.f32.mrf.mxu0
    %v217 = vadd.f32 %v97, %v216
    %218 = vmatmul.bf16.gmra.mxu0 %v195
    %v219 = vpop.f32.mrf.mxu0
    %v220 = vadd.f32 %v97, %v219
    %v221 = vpop.f32.mrf.mxu0
    %v222 = vadd.f32 %v97, %v221
    %223 = vmatmul.bf16.gmra.mxu0 %v198
    %v224 = vpop.f32.mrf.mxu0
    %v225 = vadd.f32 %v97, %v224
    %v226 = vpop.f32.mrf.mxu0
    %v227 = vadd.f32 %v97, %v226
    %228 = vdwg.mxu0
    %229 = vmatpush.bf16.msra.mxu0 0
    %230 = vmatpush.bf16.msra.mxu0 0
    %231 = vmatpush.bf16.msra.mxu0 0
    %232 = vmatpush.bf16.msra.mxu0 0
    %233 = vmatpush.bf16.msra.mxu0 %v173
    %234 = vmatpush.bf16.msra.mxu0 %v170
    %235 = vmatpush.bf16.msra.mxu0 %v167
    %236 = vmatpush.bf16.msra.mxu0 %v164
    %237 = vmatmul.bf16.gmra.mxu0 %v189
    %v238 = vpop.f32.mrf.mxu0
    %v239 = vadd.f32 %v98, %v238
    %v240 = vpop.f32.mrf.mxu0
    %v241 = vadd.f32 %v98, %v240
    %242 = vmatmul.bf16.gmra.mxu0 %v192
    %v243 = vpop.f32.mrf.mxu0
    %v244 = vadd.f32 %v98, %v243
    %v245 = vpop.f32.mrf.mxu0
    %v246 = vadd.f32 %v98, %v245
    %247 = vmatmul.bf16.gmra.mxu0 %v195
    %v248 = vpop.f32.mrf.mxu0
    %v249 = vadd.f32 %v98, %v248
    %v250 = vpop.f32.mrf.mxu0
    %v251 = vadd.f32 %v98, %v250
    %252 = vmatmul.bf16.gmra.mxu0 %v198
    %v253 = vpop.f32.mrf.mxu0
    %v254 = vadd.f32 %v98, %v253
    %v255 = vpop.f32.mrf.mxu0
    %v256 = vadd.f32 %v98, %v255
    %257 = vdwg.mxu0
    %258 = vmatpush.bf16.msra.mxu0 0
    %259 = vmatpush.bf16.msra.mxu0 0
    %260 = vmatpush.bf16.msra.mxu0 0
    %261 = vmatpush.bf16.msra.mxu0 0
    %262 = vmatpush.bf16.msra.mxu0 %v174
    %263 = vmatpush.bf16.msra.mxu0 %v171
    %264 = vmatpush.bf16.msra.mxu0 %v168
    %265 = vmatpush.bf16.msra.mxu0 %v165
    %266 = vmatmul.bf16.gmra.mxu0 %v189
    %v267 = vpop.f32.mrf.mxu0
    %v268 = vadd.f32 %v99, %v267
    %v269 = vpop.f32.mrf.mxu0
    %v270 = vadd.f32 %v99, %v269
    %271 = vmatmul.bf16.gmra.mxu0 %v192
    %v272 = vpop.f32.mrf.mxu0
    %v273 = vadd.f32 %v99, %v272
    %v274 = vpop.f32.mrf.mxu0
    %v275 = vadd.f32 %v99, %v274
    %276 = vmatmul.bf16.gmra.mxu0 %v195
    %v277 = vpop.f32.mrf.mxu0
    %v278 = vadd.f32 %v99, %v277
    %v279 = vpop.f32.mrf.mxu0
    %v280 = vadd.f32 %v99, %v279
    %281 = vmatmul.bf16.gmra.mxu0 %v198
    %v282 = vpop.f32.mrf.mxu0
    %v283 = vadd.f32 %v99, %v282
    %v284 = vpop.f32.mrf.mxu0
    %v285 = vadd.f32 %v99, %v284
    %286 = vdwg.mxu0
    %v287 = vld [vmem:[#allocation4] sm:$0xff]
    %v288 = vld [vmem:[#allocation4 + $0x8] sm:$0xf]
    %v289 = vld [vmem:[#allocation4 + $0xc] sm:$0xff]
    %v290 = vld [vmem:[#allocation4 + $0x14] sm:$0xf]
    %v291 = vld [vmem:[#allocation4 + $0x18] sm:$0xff]
    %v292 = vld [vmem:[#allocation4 + $0x20] sm:$0xf]
    %v293 = vld [vmem:[#allocation4 + $0x24] sm:$0xff]
    %v294 = vld [vmem:[#allocation4 + $0x2c] sm:$0xf]
    %v295 = vld [vmem:[#allocation4 + $0x30] sm:$0xff]
    %v296 = vld [vmem:[#allocation4 + $0x38] sm:$0xf]
    %v297 = vld [vmem:[#allocation4 + $0x3c] sm:$0xff]
    %v298 = vld [vmem:[#allocation4 + $0x44] sm:$0xf]
    %v299 = vld [vmem:[#allocation4 + $0x48] sm:$0xff]
    %v300 = vld [vmem:[#allocation4 + $0x50] sm:$0xf]
    %v301 = vld [vmem:[#allocation4 + $0x54] sm:$0xff]
    %v302 = vld [vmem:[#allocation4 + $0x5c] sm:$0xf]
    %v303 = vld [vmem:[#allocation4 + $0x60] sm:$0xff]
    %v304 = vld [vmem:[#allocation4 + $0x68] sm:$0xf]
    %v305 = vld [vmem:[#allocation4 + $0x6c] sm:$0xff]
    %v306 = vld [vmem:[#allocation4 + $0x74] sm:$0xf]
    %v307 = vld [vmem:[#allocation4 + $0x78] sm:$0xff]
    %v308 = vld [vmem:[#allocation4 + $0x80] sm:$0xf]
    %v309 = vld [vmem:[#allocation4 + $0x84] sm:$0xff]
    %v310 = vld [vmem:[#allocation4 + $0x8c] sm:$0xf]
    %v311 = vld [vmem:[#allocation4 + $0x90] sm:$0xff]
    %v312 = vld [vmem:[#allocation4 + $0x98] sm:$0xf]
    %v313 = vld [vmem:[#allocation4 + $0x9c] sm:$0xff]
    %v314 = vld [vmem:[#allocation4 + $0xa4] sm:$0xf]
    %v315 = vld [vmem:[#allocation4 + $0xa8] sm:$0xff]
    %v316 = vld [vmem:[#allocation4 + $0xb0] sm:$0xf]
    %v317 = vld [vmem:[#allocation4 + $0xb4] sm:$0xff]
    %v318 = vld [vmem:[#allocation4 + $0xbc] sm:$0xf]
    %v319 = vld [vmem:[%s4] sm:$0x1]
    %v352 = vunpack.c.l.b16 %v287
    %v353 = vunpack.c.h.b16 %v287
    %v354 = vunpack.c.l.b16 %v288
    %v355 = vunpack.c.l.b16 %v289
    %v356 = vunpack.c.h.b16 %v289
    %v357 = vunpack.c.l.b16 %v290
    %v358 = vunpack.c.l.b16 %v291
    %v359 = vunpack.c.h.b16 %v291
    %v360 = vunpack.c.l.b16 %v292
    %v361 = vunpack.c.l.b16 %v293
    %v362 = vunpack.c.h.b16 %v293
    %v363 = vunpack.c.l.b16 %v294
    %v364 = vunpack.c.l.b16 %v295
    %v365 = vunpack.c.h.b16 %v295
    %v366 = vunpack.c.l.b16 %v296
    %v367 = vunpack.c.l.b16 %v297
    %v368 = vunpack.c.h.b16 %v297
    %v369 = vunpack.c.l.b16 %v298
    %v370 = vunpack.c.l.b16 %v299
    %v371 = vunpack.c.h.b16 %v299
    %v372 = vunpack.c.l.b16 %v300
    %v373 = vunpack.c.l.b16 %v301
    %v374 = vunpack.c.h.b16 %v301
    %v375 = vunpack.c.l.b16 %v302
    %v376 = vunpack.c.l.b16 %v303
    %v377 = vunpack.c.h.b16 %v303
    %v378 = vunpack.c.l.b16 %v304
    %v379 = vunpack.c.l.b16 %v305
    %v380 = vunpack.c.h.b16 %v305
    %v381 = vunpack.c.l.b16 %v306
    %v382 = vunpack.c.l.b16 %v307
    %v383 = vunpack.c.h.b16 %v307
    %v384 = vunpack.c.l.b16 %v308
    %v385 = vunpack.c.l.b16 %v309
    %v386 = vunpack.c.h.b16 %v309
    %v387 = vunpack.c.l.b16 %v310
    %v388 = vunpack.c.l.b16 %v311
    %v389 = vunpack.c.h.b16 %v311
    %v390 = vunpack.c.l.b16 %v312
    %v391 = vunpack.c.l.b16 %v313
    %v392 = vunpack.c.h.b16 %v313
    %v393 = vunpack.c.l.b16 %v314
    %v394 = vunpack.c.l.b16 %v315
    %v395 = vunpack.c.h.b16 %v315
    %v396 = vunpack.c.l.b16 %v316
    %v397 = vunpack.c.l.b16 %v317
    %v398 = vunpack.c.h.b16 %v317
    %v399 = vunpack.c.l.b16 %v318
    %v400 = vpack.c.b16 %v355, %v352
    %v401 = vpack.c.b16 %v356, %v353
    %v402 = vpack.c.b16 %v357, %v354
    %v403 = vpack.c.b16 %v361, %v358
    %v404 = vpack.c.b16 %v362, %v359
    %v405 = vpack.c.b16 %v363, %v360
    %v406 = vpack.c.b16 %v367, %v364
    %v407 = vpack.c.b16 %v368, %v365
    %v408 = vpack.c.b16 %v369, %v366
    %v409 = vpack.c.b16 %v373, %v370
    %v410 = vpack.c.b16 %v374, %v371
    %v411 = vpack.c.b16 %v375, %v372
    %v412 = vpack.c.b16 %v379, %v376
    %v413 = vpack.c.b16 %v380, %v377
    %v414 = vpack.c.b16 %v381, %v378
    %v415 = vpack.c.b16 %v385, %v382
    %v416 = vpack.c.b16 %v386, %v383
    %v417 = vpack.c.b16 %v387, %v384
    %v418 = vpack.c.b16 %v391, %v388
    %v419 = vpack.c.b16 %v392, %v389
    %v420 = vpack.c.b16 %v393, %v390
    %v421 = vpack.c.b16 %v397, %v394
    %v422 = vpack.c.b16 %v398, %v395
    %v423 = vpack.c.b16 %v399, %v396
    %448 = vmatpush.bf16.msra.mxu0 %v421
    %449 = vmatpush.bf16.msra.mxu0 %v418
    %450 = vmatpush.bf16.msra.mxu0 %v415
    %451 = vmatpush.bf16.msra.mxu0 %v412
    %452 = vmatpush.bf16.msra.mxu0 %v409
    %453 = vmatpush.bf16.msra.mxu0 %v406
    %454 = vmatpush.bf16.msra.mxu0 %v403
    %455 = vmatpush.bf16.msra.mxu0 %v400
    %456 = vmatmul.bf16.gmra.mxu0 0
    %v457 = vpop.f32.mrf.mxu0
    %v458 = vadd.f32 0.0, %v457
    %v459 = vpop.f32.mrf.mxu0
    %460 = vdwg.mxu0
    %461 = vmatpush.bf16.msra.mxu0 %v422
    %462 = vmatpush.bf16.msra.mxu0 %v419
    %463 = vmatpush.bf16.msra.mxu0 %v416
    %464 = vmatpush.bf16.msra.mxu0 %v413
    %465 = vmatpush.bf16.msra.mxu0 %v410
    %466 = vmatpush.bf16.msra.mxu0 %v407
    %467 = vmatpush.bf16.msra.mxu0 %v404
    %468 = vmatpush.bf16.msra.mxu0 %v401
    %469 = vmatmul.bf16.gmra.mxu0 0
    %v470 = vpop.f32.mrf.mxu0
    %v471 = vadd.f32 0.0, %v470
    %v472 = vpop.f32.mrf.mxu0
    %473 = vdwg.mxu0
    %474 = vmatpush.bf16.msra.mxu0 %v423
    %475 = vmatpush.bf16.msra.mxu0 %v420
    %476 = vmatpush.bf16.msra.mxu0 %v417
    %477 = vmatpush.bf16.msra.mxu0 %v414
    %478 = vmatpush.bf16.msra.mxu0 %v411
    %479 = vmatpush.bf16.msra.mxu0 %v408
    %480 = vmatpush.bf16.msra.mxu0 %v405
    %481 = vmatpush.bf16.msra.mxu0 %v402
    %482 = vmatmul.bf16.gmra.mxu0 0
    %v483 = vpop.f32.mrf.mxu0
    %v484 = vadd.f32 0.0, %v483
    %v485 = vpop.f32.mrf.mxu0
    %486 = vdwg.mxu0
    %v487 = vadd.f32 %v210, %v458
    %v488 = vadd.f32 %v239, %v471
    %v489 = vmul.f32 %v487, 0.5
    %v490 = vmul.f32 %v488, 0.5
    %v491 = vtanh.pop %v489
    %v492 = vtanh.pop %v490
    %v493 = vmul.f32 %v491, 0.5
    %v494 = vmul.f32 %v492, 0.5
    %v495 = vadd.f32 %v493, 0.5
    %v496 = vadd.f32 %v494, 0.5
    %v498 = vperm.slane %v319, 0
    %v500 = vadd.f32 %v484, %v498
    %v501 = vmul.f32 %v495, %v500
    %v502 = vadd.f32 %v268, %v501
    %v503 = vtanh.pop %v502
    %v504 = vsub.f32 1.0, %v496
    %v505 = vmul.f32 %v504, %v503
    %v506 = vmul.f32 %v496, 0.0
    %v507 = vadd.f32 %v505, %v506
    %v508 = vpack.c.bf16 %v507, %v507
    %509 = vmatpush.bf16.msra.mxu0 %v421
    %510 = vmatpush.bf16.msra.mxu0 %v418
    %511 = vmatpush.bf16.msra.mxu0 %v415
    %512 = vmatpush.bf16.msra.mxu0 %v412
    %513 = vmatpush.bf16.msra.mxu0 %v409
    %514 = vmatpush.bf16.msra.mxu0 %v406
    %515 = vmatpush.bf16.msra.mxu0 %v403
    %516 = vmatpush.bf16.msra.mxu0 %v400
    %517 = vmatmul.bf16.gmra.mxu0 %v508
    %v518 = vpop.f32.mrf.mxu0
    %v519 = vadd.f32 0.0, %v518
    %v520 = vpop.f32.mrf.mxu0
    %521 = vdwg.mxu0
    %522 = vmatpush.bf16.msra.mxu0 %v422
    %523 = vmatpush.bf16.msra.mxu0 %v419
    %524 = vmatpush.bf16.msra.mxu0 %v416
    %525 = vmatpush.bf16.msra.mxu0 %v413
    %526 = vmatpush.bf16.msra.mxu0 %v410
    %527 = vmatpush.bf16.msra.mxu0 %v407
    %528 = vmatpush.bf16.msra.mxu0 %v404
    %529 = vmatpush.bf16.msra.mxu0 %v401
    %530 = vmatmul.bf16.gmra.mxu0 %v508
    %v531 = vpop.f32.mrf.mxu0
    %v532 = vadd.f32 0.0, %v531
    %v533 = vpop.f32.mrf.mxu0
    %534 = vdwg.mxu0
    %535 = vmatpush.bf16.msra.mxu0 %v423
    %536 = vmatpush.bf16.msra.mxu0 %v420
    %537 = vmatpush.bf16.msra.mxu0 %v417
    %538 = vmatpush.bf16.msra.mxu0 %v414
    %539 = vmatpush.bf16.msra.mxu0 %v411
    %540 = vmatpush.bf16.msra.mxu0 %v408
    %541 = vmatpush.bf16.msra.mxu0 %v405
    %542 = vmatpush.bf16.msra.mxu0 %v402
    %543 = vmatmul.bf16.gmra.mxu0 %v508
    %v544 = vpop.f32.mrf.mxu0
    %v545 = vadd.f32 0.0, %v544
    %v546 = vpop.f32.mrf.mxu0
    %547 = vdwg.mxu0
    %v548 = vadd.f32 %v212, %v519
    %v549 = vadd.f32 %v241, %v532
    %v550 = vmul.f32 %v548, 0.5
    %v551 = vmul.f32 %v549, 0.5
    %v552 = vtanh.pop %v550
    %v553 = vtanh.pop %v551
    %v554 = vmul.f32 %v552, 0.5
    %v555 = vmul.f32 %v553, 0.5
    %v556 = vadd.f32 %v554, 0.5
    %v557 = vadd.f32 %v555, 0.5
    %v558 = vadd.f32 %v545, %v498
    %v559 = vmul.f32 %v556, %v558
    %v560 = vadd.f32 %v270, %v559
    %v561 = vtanh.pop %v560
    %v562 = vsub.f32 1.0, %v557
    %v563 = vmul.f32 %v562, %v561
    %v564 = vmul.f32 %v557, %v507
    %v565 = vadd.f32 %v563, %v564
    %v566 = vpack.c.bf16 %v565, %v565
    %567 = vmatpush.bf16.msra.mxu0 %v421
    %568 = vmatpush.bf16.msra.mxu0 %v418
    %569 = vmatpush.bf16.msra.mxu0 %v415
    %570 = vmatpush.bf16.msra.mxu0 %v412
    %571 = vmatpush.bf16.msra.mxu0 %v409
    %572 = vmatpush.bf16.msra.mxu0 %v406
    %573 = vmatpush.bf16.msra.mxu0 %v403
    %574 = vmatpush.bf16.msra.mxu0 %v400
    %575 = vmatmul.bf16.gmra.mxu0 %v566
    %v576 = vpop.f32.mrf.mxu0
    %v577 = vadd.f32 0.0, %v576
    %v578 = vpop.f32.mrf.mxu0
    %579 = vdwg.mxu0
    %580 = vmatpush.bf16.msra.mxu0 %v422
    %581 = vmatpush.bf16.msra.mxu0 %v419
    %582 = vmatpush.bf16.msra.mxu0 %v416
    %583 = vmatpush.bf16.msra.mxu0 %v413
    %584 = vmatpush.bf16.msra.mxu0 %v410
    %585 = vmatpush.bf16.msra.mxu0 %v407
    %586 = vmatpush.bf16.msra.mxu0 %v404
    %587 = vmatpush.bf16.msra.mxu0 %v401
    %588 = vmatmul.bf16.gmra.mxu0 %v566
    %v589 = vpop.f32.mrf.mxu0
    %v590 = vadd.f32 0.0, %v589
    %v591 = vpop.f32.mrf.mxu0
    %592 = vdwg.mxu0
    %593 = vmatpush.bf16.msra.mxu0 %v423
    %594 = vmatpush.bf16.msra.mxu0 %v420
    %595 = vmatpush.bf16.msra.mxu0 %v417
    %596 = vmatpush.bf16.msra.mxu0 %v414
    %597 = vmatpush.bf16.msra.mxu0 %v411
    %598 = vmatpush.bf16.msra.mxu0 %v408
    %599 = vmatpush.bf16.msra.mxu0 %v405
    %600 = vmatpush.bf16.msra.mxu0 %v402
    %601 = vmatmul.bf16.gmra.mxu0 %v566
    %v602 = vpop.f32.mrf.mxu0
    %v603 = vadd.f32 0.0, %v602
    %v604 = vpop.f32.mrf.mxu0
    %605 = vdwg.mxu0
    %v606 = vadd.f32 %v215, %v577
    %v607 = vadd.f32 %v244, %v590
    %v608 = vmul.f32 %v606, 0.5
    %v609 = vmul.f32 %v607, 0.5
    %v610 = vtanh.pop %v608
    %v611 = vtanh.pop %v609
    %v612 = vmul.f32 %v610, 0.5
    %v613 = vmul.f32 %v611, 0.5
    %v614 = vadd.f32 %v612, 0.5
    %v615 = vadd.f32 %v613, 0.5
    %v616 = vadd.f32 %v603, %v498
    %v617 = vmul.f32 %v614, %v616
    %v618 = vadd.f32 %v273, %v617
    %v619 = vtanh.pop %v618
    %v620 = vsub.f32 1.0, %v615
    %v621 = vmul.f32 %v620, %v619
    %v622 = vmul.f32 %v615, %v565
    %v623 = vadd.f32 %v621, %v622
    %v624 = vpack.c.bf16 %v623, %v623
    %625 = vmatpush.bf16.msra.mxu0 %v421
    %626 = vmatpush.bf16.msra.mxu0 %v418
    %627 = vmatpush.bf16.msra.mxu0 %v415
    %628 = vmatpush.bf16.msra.mxu0 %v412
    %629 = vmatpush.bf16.msra.mxu0 %v409
    %630 = vmatpush.bf16.msra.mxu0 %v406
    %631 = vmatpush.bf16.msra.mxu0 %v403
    %632 = vmatpush.bf16.msra.mxu0 %v400
    %633 = vmatmul.bf16.gmra.mxu0 %v624
    %v634 = vpop.f32.mrf.mxu0
    %v635 = vadd.f32 0.0, %v634
    %v636 = vpop.f32.mrf.mxu0
    %637 = vdwg.mxu0
    %638 = vmatpush.bf16.msra.mxu0 %v422
    %639 = vmatpush.bf16.msra.mxu0 %v419
    %640 = vmatpush.bf16.msra.mxu0 %v416
    %641 = vmatpush.bf16.msra.mxu0 %v413
    %642 = vmatpush.bf16.msra.mxu0 %v410
    %643 = vmatpush.bf16.msra.mxu0 %v407
    %644 = vmatpush.bf16.msra.mxu0 %v404
    %645 = vmatpush.bf16.msra.mxu0 %v401
    %646 = vmatmul.bf16.gmra.mxu0 %v624
    %v647 = vpop.f32.mrf.mxu0
    %v648 = vadd.f32 0.0, %v647
    %v649 = vpop.f32.mrf.mxu0
    %650 = vdwg.mxu0
    %651 = vmatpush.bf16.msra.mxu0 %v423
    %652 = vmatpush.bf16.msra.mxu0 %v420
    %653 = vmatpush.bf16.msra.mxu0 %v417
    %654 = vmatpush.bf16.msra.mxu0 %v414
    %655 = vmatpush.bf16.msra.mxu0 %v411
    %656 = vmatpush.bf16.msra.mxu0 %v408
    %657 = vmatpush.bf16.msra.mxu0 %v405
    %658 = vmatpush.bf16.msra.mxu0 %v402
    %659 = vmatmul.bf16.gmra.mxu0 %v624
    %v660 = vpop.f32.mrf.mxu0
    %v661 = vadd.f32 0.0, %v660
    %v662 = vpop.f32.mrf.mxu0
    %663 = vdwg.mxu0
    %v664 = vadd.f32 %v217, %v635
    %v665 = vadd.f32 %v246, %v648
    %v666 = vmul.f32 %v664, 0.5
    %v667 = vmul.f32 %v665, 0.5
    %v668 = vtanh.pop %v666
    %v669 = vtanh.pop %v667
    %v670 = vmul.f32 %v668, 0.5
    %v671 = vmul.f32 %v669, 0.5
    %v672 = vadd.f32 %v670, 0.5
    %v673 = vadd.f32 %v671, 0.5
    %v674 = vadd.f32 %v661, %v498
    %v675 = vmul.f32 %v672, %v674
    %v676 = vadd.f32 %v275, %v675
    %v677 = vtanh.pop %v676
    %v678 = vsub.f32 1.0, %v673
    %v679 = vmul.f32 %v678, %v677
    %v680 = vmul.f32 %v673, %v623
    %v681 = vadd.f32 %v679, %v680
    %v682 = vpack.c.bf16 %v681, %v681
    %683 = vmatpush.bf16.msra.mxu0 %v421
    %684 = vmatpush.bf16.msra.mxu0 %v418
    %685 = vmatpush.bf16.msra.mxu0 %v415
    %686 = vmatpush.bf16.msra.mxu0 %v412
    %687 = vmatpush.bf16.msra.mxu0 %v409
    %688 = vmatpush.bf16.msra.mxu0 %v406
    %689 = vmatpush.bf16.msra.mxu0 %v403
    %690 = vmatpush.bf16.msra.mxu0 %v400
    %691 = vmatmul.bf16.gmra.mxu0 %v682
    %v692 = vpop.f32.mrf.mxu0
    %v693 = vadd.f32 0.0, %v692
    %v694 = vpop.f32.mrf.mxu0
    %695 = vdwg.mxu0
    %696 = vmatpush.bf16.msra.mxu0 %v422
    %697 = vmatpush.bf16.msra.mxu0 %v419
    %698 = vmatpush.bf16.msra.mxu0 %v416
    %699 = vmatpush.bf16.msra.mxu0 %v413
    %700 = vmatpush.bf16.msra.mxu0 %v410
    %701 = vmatpush.bf16.msra.mxu0 %v407
    %702 = vmatpush.bf16.msra.mxu0 %v404
    %703 = vmatpush.bf16.msra.mxu0 %v401
    %704 = vmatmul.bf16.gmra.mxu0 %v682
    %v705 = vpop.f32.mrf.mxu0
    %v706 = vadd.f32 0.0, %v705
    %v707 = vpop.f32.mrf.mxu0
    %708 = vdwg.mxu0
    %709 = vmatpush.bf16.msra.mxu0 %v423
    %710 = vmatpush.bf16.msra.mxu0 %v420
    %711 = vmatpush.bf16.msra.mxu0 %v417
    %712 = vmatpush.bf16.msra.mxu0 %v414
    %713 = vmatpush.bf16.msra.mxu0 %v411
    %714 = vmatpush.bf16.msra.mxu0 %v408
    %715 = vmatpush.bf16.msra.mxu0 %v405
    %716 = vmatpush.bf16.msra.mxu0 %v402
    %717 = vmatmul.bf16.gmra.mxu0 %v682
    %v718 = vpop.f32.mrf.mxu0
    %v719 = vadd.f32 0.0, %v718
    %v720 = vpop.f32.mrf.mxu0
    %721 = vdwg.mxu0
    %v722 = vadd.f32 %v220, %v693
    %v723 = vadd.f32 %v249, %v706
    %v724 = vmul.f32 %v722, 0.5
    %v725 = vmul.f32 %v723, 0.5
    %v726 = vtanh.pop %v724
    %v727 = vtanh.pop %v725
    %v728 = vmul.f32 %v726, 0.5
    %v729 = vmul.f32 %v727, 0.5
    %v730 = vadd.f32 %v728, 0.5
    %v731 = vadd.f32 %v729, 0.5
    %v732 = vadd.f32 %v719, %v498
    %v733 = vmul.f32 %v730, %v732
    %v734 = vadd.f32 %v278, %v733
    %v735 = vtanh.pop %v734
    %v736 = vsub.f32 1.0, %v731
    %v737 = vmul.f32 %v736, %v735
    %v738 = vmul.f32 %v731, %v681
    %v739 = vadd.f32 %v737, %v738
    %v740 = vpack.c.bf16 %v739, %v739
    %741 = vmatpush.bf16.msra.mxu0 %v421
    %742 = vmatpush.bf16.msra.mxu0 %v418
    %743 = vmatpush.bf16.msra.mxu0 %v415
    %744 = vmatpush.bf16.msra.mxu0 %v412
    %745 = vmatpush.bf16.msra.mxu0 %v409
    %746 = vmatpush.bf16.msra.mxu0 %v406
    %747 = vmatpush.bf16.msra.mxu0 %v403
    %748 = vmatpush.bf16.msra.mxu0 %v400
    %749 = vmatmul.bf16.gmra.mxu0 %v740
    %v750 = vpop.f32.mrf.mxu0
    %v751 = vadd.f32 0.0, %v750
    %v752 = vpop.f32.mrf.mxu0
    %753 = vdwg.mxu0
    %754 = vmatpush.bf16.msra.mxu0 %v422
    %755 = vmatpush.bf16.msra.mxu0 %v419
    %756 = vmatpush.bf16.msra.mxu0 %v416
    %757 = vmatpush.bf16.msra.mxu0 %v413
    %758 = vmatpush.bf16.msra.mxu0 %v410
    %759 = vmatpush.bf16.msra.mxu0 %v407
    %760 = vmatpush.bf16.msra.mxu0 %v404
    %761 = vmatpush.bf16.msra.mxu0 %v401
    %762 = vmatmul.bf16.gmra.mxu0 %v740
    %v763 = vpop.f32.mrf.mxu0
    %v764 = vadd.f32 0.0, %v763
    %v765 = vpop.f32.mrf.mxu0
    %766 = vdwg.mxu0
    %767 = vmatpush.bf16.msra.mxu0 %v423
    %768 = vmatpush.bf16.msra.mxu0 %v420
    %769 = vmatpush.bf16.msra.mxu0 %v417
    %770 = vmatpush.bf16.msra.mxu0 %v414
    %771 = vmatpush.bf16.msra.mxu0 %v411
    %772 = vmatpush.bf16.msra.mxu0 %v408
    %773 = vmatpush.bf16.msra.mxu0 %v405
    %774 = vmatpush.bf16.msra.mxu0 %v402
    %775 = vmatmul.bf16.gmra.mxu0 %v740
    %v776 = vpop.f32.mrf.mxu0
    %v777 = vadd.f32 0.0, %v776
    %v778 = vpop.f32.mrf.mxu0
    %779 = vdwg.mxu0
    %v780 = vadd.f32 %v222, %v751
    %v781 = vadd.f32 %v251, %v764
    %v782 = vmul.f32 %v780, 0.5
    %v783 = vmul.f32 %v781, 0.5
    %v784 = vtanh.pop %v782
    %v785 = vtanh.pop %v783
    %v786 = vmul.f32 %v784, 0.5
    %v787 = vmul.f32 %v785, 0.5
    %v788 = vadd.f32 %v786, 0.5
    %v789 = vadd.f32 %v787, 0.5
    %v790 = vadd.f32 %v777, %v498
    %v791 = vmul.f32 %v788, %v790
    %v792 = vadd.f32 %v280, %v791
    %v793 = vtanh.pop %v792
    %v794 = vsub.f32 1.0, %v789
    %v795 = vmul.f32 %v794, %v793
    %v796 = vmul.f32 %v789, %v739
    %v797 = vadd.f32 %v795, %v796
    %v798 = vpack.c.bf16 %v797, %v797
    %799 = vmatpush.bf16.msra.mxu0 %v421
    %800 = vmatpush.bf16.msra.mxu0 %v418
    %801 = vmatpush.bf16.msra.mxu0 %v415
    %802 = vmatpush.bf16.msra.mxu0 %v412
    %803 = vmatpush.bf16.msra.mxu0 %v409
    %804 = vmatpush.bf16.msra.mxu0 %v406
    %805 = vmatpush.bf16.msra.mxu0 %v403
    %806 = vmatpush.bf16.msra.mxu0 %v400
    %807 = vmatmul.bf16.gmra.mxu0 %v798
    %v808 = vpop.f32.mrf.mxu0
    %v809 = vadd.f32 0.0, %v808
    %v810 = vpop.f32.mrf.mxu0
    %811 = vdwg.mxu0
    %812 = vmatpush.bf16.msra.mxu0 %v422
    %813 = vmatpush.bf16.msra.mxu0 %v419
    %814 = vmatpush.bf16.msra.mxu0 %v416
    %815 = vmatpush.bf16.msra.mxu0 %v413
    %816 = vmatpush.bf16.msra.mxu0 %v410
    %817 = vmatpush.bf16.msra.mxu0 %v407
    %818 = vmatpush.bf16.msra.mxu0 %v404
    %819 = vmatpush.bf16.msra.mxu0 %v401
    %820 = vmatmul.bf16.gmra.mxu0 %v798
    %v821 = vpop.f32.mrf.mxu0
    %v822 = vadd.f32 0.0, %v821
    %v823 = vpop.f32.mrf.mxu0
    %824 = vdwg.mxu0
    %825 = vmatpush.bf16.msra.mxu0 %v423
    %826 = vmatpush.bf16.msra.mxu0 %v420
    %827 = vmatpush.bf16.msra.mxu0 %v417
    %828 = vmatpush.bf16.msra.mxu0 %v414
    %829 = vmatpush.bf16.msra.mxu0 %v411
    %830 = vmatpush.bf16.msra.mxu0 %v408
    %831 = vmatpush.bf16.msra.mxu0 %v405
    %832 = vmatpush.bf16.msra.mxu0 %v402
    %833 = vmatmul.bf16.gmra.mxu0 %v798
    %v834 = vpop.f32.mrf.mxu0
    %v835 = vadd.f32 0.0, %v834
    %v836 = vpop.f32.mrf.mxu0
    %837 = vdwg.mxu0
    %v838 = vadd.f32 %v225, %v809
    %v839 = vadd.f32 %v254, %v822
    %v840 = vmul.f32 %v838, 0.5
    %v841 = vmul.f32 %v839, 0.5
    %v842 = vtanh.pop %v840
    %v843 = vtanh.pop %v841
    %v844 = vmul.f32 %v842, 0.5
    %v845 = vmul.f32 %v843, 0.5
    %v846 = vadd.f32 %v844, 0.5
    %v847 = vadd.f32 %v845, 0.5
    %v848 = vadd.f32 %v835, %v498
    %v849 = vmul.f32 %v846, %v848
    %v850 = vadd.f32 %v283, %v849
    %v851 = vtanh.pop %v850
    %v852 = vsub.f32 1.0, %v847
    %v853 = vmul.f32 %v852, %v851
    %v854 = vmul.f32 %v847, %v797
    %v855 = vadd.f32 %v853, %v854
    %v856 = vpack.c.bf16 %v855, %v855
    %857 = vmatpush.bf16.msra.mxu0 %v421
    %858 = vmatpush.bf16.msra.mxu0 %v418
    %859 = vmatpush.bf16.msra.mxu0 %v415
    %860 = vmatpush.bf16.msra.mxu0 %v412
    %861 = vmatpush.bf16.msra.mxu0 %v409
    %862 = vmatpush.bf16.msra.mxu0 %v406
    %863 = vmatpush.bf16.msra.mxu0 %v403
    %864 = vmatpush.bf16.msra.mxu0 %v400
    %865 = vmatmul.bf16.gmra.mxu0 %v856
    %v866 = vpop.f32.mrf.mxu0
    %v867 = vadd.f32 0.0, %v866
    %v868 = vpop.f32.mrf.mxu0
    %869 = vdwg.mxu0
    %870 = vmatpush.bf16.msra.mxu0 %v422
    %871 = vmatpush.bf16.msra.mxu0 %v419
    %872 = vmatpush.bf16.msra.mxu0 %v416
    %873 = vmatpush.bf16.msra.mxu0 %v413
    %874 = vmatpush.bf16.msra.mxu0 %v410
    %875 = vmatpush.bf16.msra.mxu0 %v407
    %876 = vmatpush.bf16.msra.mxu0 %v404
    %877 = vmatpush.bf16.msra.mxu0 %v401
    %878 = vmatmul.bf16.gmra.mxu0 %v856
    %v879 = vpop.f32.mrf.mxu0
    %v880 = vadd.f32 0.0, %v879
    %v881 = vpop.f32.mrf.mxu0
    %882 = vdwg.mxu0
    %883 = vmatpush.bf16.msra.mxu0 %v423
    %884 = vmatpush.bf16.msra.mxu0 %v420
    %885 = vmatpush.bf16.msra.mxu0 %v417
    %886 = vmatpush.bf16.msra.mxu0 %v414
    %887 = vmatpush.bf16.msra.mxu0 %v411
    %888 = vmatpush.bf16.msra.mxu0 %v408
    %889 = vmatpush.bf16.msra.mxu0 %v405
    %890 = vmatpush.bf16.msra.mxu0 %v402
    %891 = vmatmul.bf16.gmra.mxu0 %v856
    %v892 = vpop.f32.mrf.mxu0
    %v893 = vadd.f32 0.0, %v892
    %v894 = vpop.f32.mrf.mxu0
    %895 = vdwg.mxu0
    %v896 = vadd.f32 %v227, %v867
    %v897 = vadd.f32 %v256, %v880
    %v898 = vmul.f32 %v896, 0.5
    %v899 = vmul.f32 %v897, 0.5
    %v900 = vtanh.pop %v898
    %v901 = vtanh.pop %v899
    %v902 = vmul.f32 %v900, 0.5
    %v903 = vmul.f32 %v901, 0.5
    %v904 = vadd.f32 %v902, 0.5
    %v905 = vadd.f32 %v903, 0.5
    %v906 = vadd.f32 %v893, %v498
    %v907 = vmul.f32 %v904, %v906
    %v908 = vadd.f32 %v285, %v907
    %v909 = vtanh.pop %v908
    %v910 = vsub.f32 1.0, %v905
    %v911 = vmul.f32 %v910, %v909
    %v912 = vmul.f32 %v905, %v855
    %v913 = vadd.f32 %v911, %v912
    %v914 = vsel %vm187, %v913, 0.0
    %915 = vadd.xlane.f32.xlu0 %v914
    %v916 = vpop.xlane.xlu0 %915
    %v917 = vrcp.pop 64.0
    %v918 = vmul.f32 64.0, %v917
    %v919 = vsub.f32 1.0, %v918
    %v920 = vmul.f32 %v917, %v919
    %v921 = vadd.f32 %v917, %v920
    %vm922 = vweird.f32 %v917
    %v923 = vsel %vm922, %v917, %v921
    %v924 = vmul.f32 %v916, %v923
    %v925 = vsub.f32 %v913, %v924
    %v926 = vmul.f32 %v925, %v925
    %v927 = vsel %vm187, %v926, 0.0
    %928 = vadd.xlane.f32.xlu0 %v927
    %v929 = vpop.xlane.xlu0 %928
    %v930 = vmul.f32 %v929, %v923
    %v931 = vadd.f32 %v930, 1e-05
    %v932 = vrsqrt.pop %v931
    %v933 = vmul.f32 %v932, %v931
    %v934 = vmul.f32 %v933, %v932
    %v935 = vmul.f32 0.5, %v934
    %v936 = vsub.f32 1.5, %v935
    %v937 = vmul.f32 %v932, %v936
    %vm938 = vweird.f32 %v931
    %vm939 = vweird.f32 %v932
    %vm940 = vmor %vm938, %vm939
    %v941 = vsel %vm940, %v932, %v937
    %v942 = vmul.f32 %v925, %v941
    %v943 = vld [vmem:[%s5] sm:$0x1]
    %v945 = vperm.slane %v943, 0
    %v947 = vmul.f32 %v942, %v945
    %v948 = vld [vmem:[%s6] sm:$0x1]
    %v950 = vperm.slane %v948, 0
    %v952 = vadd.f32 %v947, %v950
    %v953 = vpack.c.bf16 %v952, %v952
    %v954 = vld [vmem:[%s7] sm:$0xf]
    %v955 = vld [vmem:[%s7 + $0x4] sm:$0xf]
    %v956 = vld [vmem:[%s7 + $0x8] sm:$0xf]
    %v957 = vld [vmem:[%s7 + $0xc] sm:$0xf]
    %v958 = vld [vmem:[%s7 + $0x10] sm:$0xf]
    %v959 = vld [vmem:[%s7 + $0x14] sm:$0xf]
    %v960 = vld [vmem:[%s7 + $0x18] sm:$0xf]
    %v961 = vld [vmem:[%s7 + $0x1c] sm:$0xf]
    %v962 = vld [vmem:[%s8] sm:$0x1]
    %v964 = vperm.slane %v962, 0
    %v974 = vunpack.c.l.b16 %v954
    %v975 = vunpack.c.l.b16 %v955
    %v976 = vunpack.c.l.b16 %v956
    %v977 = vunpack.c.l.b16 %v957
    %v978 = vunpack.c.l.b16 %v958
    %v979 = vunpack.c.l.b16 %v959
    %v980 = vunpack.c.l.b16 %v960
    %v981 = vunpack.c.l.b16 %v961
    %v982 = vpack.c.b16 %v975, %v974
    %v983 = vpack.c.b16 %v977, %v976
    %v984 = vpack.c.b16 %v979, %v978
    %v985 = vpack.c.b16 %v981, %v980
    %v991 = vsel %vm187, %v953, 0
    %993 = vmatpush.bf16.msra.mxu0 0
    %994 = vmatpush.bf16.msra.mxu0 0
    %995 = vmatpush.bf16.msra.mxu0 0
    %996 = vmatpush.bf16.msra.mxu0 0
    %997 = vmatpush.bf16.msra.mxu0 %v985
    %998 = vmatpush.bf16.msra.mxu0 %v984
    %999 = vmatpush.bf16.msra.mxu0 %v983
    %1000 = vmatpush.bf16.msra.mxu0 %v982
    %1001 = vmatmul.bf16.gmra.mxu0 %v991
    %v1002 = vpop.f32.mrf.mxu0
    %v1003 = vadd.f32 %v964, %v1002
    %v1004 = vpop.f32.mrf.mxu0
    %1005 = vdwg.mxu0
    %v1006 = vmax.f32 %v1003, 0.0
    %v1007 = vpack.c.bf16 %v1006, %v1006
    %v1008 = vld [vmem:[%s9] sm:$0xf]
    %v1009 = vld [vmem:[%s9 + $0x4] sm:$0xf]
    %v1010 = vld [vmem:[%s9 + $0x8] sm:$0xf]
    %v1011 = vld [vmem:[%s9 + $0xc] sm:$0xf]
    %v1012 = vld [vmem:[%s10] sm:$0x1]
    %v1014 = vperm.slane %v1012, 0
    %v1020 = vunpack.c.l.b16 %v1008
    %v1021 = vunpack.c.l.b16 %v1009
    %v1022 = vunpack.c.l.b16 %v1010
    %v1023 = vunpack.c.l.b16 %v1011
    %v1024 = vpack.c.b16 %v1021, %v1020
    %v1025 = vpack.c.b16 %v1023, %v1022
    %vm1028 = vcmask 261120
    %v1030 = vsel %vm1028, %v1007, 0
    %1032 = vmatpush.bf16.msra.mxu0 0
    %1033 = vmatpush.bf16.msra.mxu0 0
    %1034 = vmatpush.bf16.msra.mxu0 0
    %1035 = vmatpush.bf16.msra.mxu0 0
    %1036 = vmatpush.bf16.msra.mxu0 0
    %1037 = vmatpush.bf16.msra.mxu0 0
    %1038 = vmatpush.bf16.msra.mxu0 %v1025
    %1039 = vmatpush.bf16.msra.mxu0 %v1024
    %1040 = vmatmul.bf16.gmra.mxu0 %v1030
    %v1041 = vpop.f32.mrf.mxu0
    %v1042 = vadd.f32 %v1014, %v1041
    %v1043 = vpop.f32.mrf.mxu0
    %1044 = vdwg.mxu0
    %vm1045 = vcmask 130048
    %1046 = vst.msk [vmem:[%s11] sm:$0xff] %vm1045, %v1042
    // Predicated region
    $region54: #{tower_two_forward.1} parent=1 // pred_check
      _
    $region55: #{tower_two_forward.1} parent=1 // pred_check_branch
      %1048 = sbr.rel (0) target = $region57
    $region56: #{tower_two_forward.1} parent=1 // pred_region
      _
    $region57: #{tower_two_forward.1} parent=1 // pred_fallthru
      _
    // Predicated region
    $region58: #{tower_two_forward.1} parent=1 // pred_check
      _
    $region59: #{tower_two_forward.1} parent=1 // pred_check_branch
      %1050 = sbr.rel (0) target = $region61
    $region60: #{tower_two_forward.1} parent=1 // pred_region
      _
    $region61: #{tower_two_forward.1} parent=1 // pred_fallthru
      _
    %1051 = vsyncpa [#allocation3], 1
    %1052 = vsyncpa [#allocation5], 1

</llo_original>
